<compile_context>
chip_gen: v7x
topology: tpu7x:2x2x1
jax: 0.10.0
libtpu: 0.0.40
codegen_flags: <defaults>
</compile_context>

<pallas_src>
import functools

import jax
import jax.numpy as jnp
from jax.experimental import pallas as pl
from jax.experimental.pallas import tpu as pltpu


def _ffn_kernel(x_ref, w1_ref, b1_ref, w2_ref, b2_ref, o_ref, acc_ref):
    # x_ref:   (tm, d_model)   compute dtype
    # w1_ref:  (d_model, tf)   compute dtype    b1_ref: (1, tf)       f32
    # w2_ref:  (tf, d_model)   compute dtype    b2_ref: (1, d_model)  f32
    # o_ref:   (tm, d_model)   output dtype
    # acc_ref: (tm, d_model)   f32 accumulator, resident across the j axis
    j = pl.program_id(1)

    @pl.when(j == 0)
    def _init():
        acc_ref[...] = jnp.zeros_like(acc_ref)

    # First matmul + bias + ReLU for this d_ff slice (f32 accumulation).
    h = jnp.dot(x_ref[...], w1_ref[...], preferred_element_type=jnp.float32)
    h = jnp.maximum(h + b1_ref[...], 0.0)
    # dropout (eval mode) == identity
    # Second matmul: accumulate this slice's contribution to the output tile.
    acc_ref[...] += jnp.dot(h.astype(w2_ref.dtype), w2_ref[...],
                            preferred_element_type=jnp.float32)

    @pl.when(j == pl.num_programs(1) - 1)
    def _finalize():
        o_ref[...] = (acc_ref[...] + b2_ref[...]).astype(o_ref.dtype)


@functools.partial(jax.jit, static_argnames=("tm", "tf", "compute_dtype"))
def feed_forward(x, w1, b1, w2, b2, *, tm=256, tf=1024,
                 compute_dtype=jnp.bfloat16):
    """x: (batch, seq, d_model) -> (batch, seq, d_model)."""
    batch, seq, d_model = x.shape
    d_ff = w1.shape[1]
    out_dtype = x.dtype

    # --- tile setup --------------------------------------------------------
    assert tm % 128 == 0, "row tile tm must be a multiple of 128"
    tf = min(tf, d_ff)
    assert d_ff % tf == 0, "d_ff must be divisible by the hidden tile tf"
    # Best performance when d_model % 128 == 0 (lane-dense output stores);
    # legal for any d_model since the block covers the full last dim.

    M = batch * seq
    M_pad = pl.cdiv(M, tm) * tm
    grid_m = M_pad // tm
    grid_f = d_ff // tf

    x2d = x.reshape(M, d_model).astype(compute_dtype)
    if M_pad != M:
        x2d = jnp.pad(x2d, ((0, M_pad - M), (0, 0)))
    w1c = w1.astype(compute_dtype)
    w2c = w2.astype(compute_dtype)
    b1_2d = b1.reshape(1, d_ff).astype(jnp.float32)
    b2_2d = b2.reshape(1, d_model).astype(jnp.float32)

    # --- VMEM budget / cost hints ------------------------------------------
    cbytes = jnp.dtype(compute_dtype).itemsize
    obytes = jnp.dtype(out_dtype).itemsize
    vmem_est = (2 * (tm * d_model * cbytes          # x tile (double buffered)
                     + d_model * tf * cbytes        # W1 slice
                     + tf * d_model * cbytes        # W2 slice
                     + (tf + d_model) * 4           # bias slices
                     + tm * d_model * obytes)       # output tile
                + tm * d_model * 4                  # f32 accumulator scratch
                + tm * tf * 4)                      # h intermediate
    vmem_limit = max(int(vmem_est * 1.5), 32 * 1024 * 1024)

    cost = pl.CostEstimate(
        flops=4 * M_pad * d_model * d_ff,           # two matmuls
        transcendentals=0,
        bytes_accessed=(M_pad * d_model * (cbytes + obytes)
                        + grid_m * (2 * d_model * d_ff * cbytes
                                    + (d_ff + d_model) * 4)),
    )

    out2d = pl.pallas_call(
        _ffn_kernel,
        out_shape=jax.ShapeDtypeStruct((M_pad, d_model), out_dtype),
        grid_spec=pltpu.PrefetchScalarGridSpec(
            num_scalar_prefetch=0,
            grid=(grid_m, grid_f),
            in_specs=[
                pl.BlockSpec((tm, d_model), lambda i, j: (i, 0)),   # x tile
                pl.BlockSpec((d_model, tf), lambda i, j: (0, j)),   # W1 slice
                pl.BlockSpec((1, tf), lambda i, j: (0, j)),         # b1 slice
                pl.BlockSpec((tf, d_model), lambda i, j: (j, 0)),   # W2 slice
                pl.BlockSpec((1, d_model), lambda i, j: (0, 0)),    # b2
            ],
            out_specs=pl.BlockSpec((tm, d_model), lambda i, j: (i, 0)),
            scratch_shapes=[pltpu.VMEM((tm, d_model), jnp.float32)],
        ),
        compiler_params=pltpu.CompilerParams(
            dimension_semantics=("parallel", "arbitrary"),
            vmem_limit_bytes=vmem_limit,
        ),
        cost_estimate=cost,
    )(x2d, w1c, b1_2d, w2c, b2_2d)

    return out2d[:M].reshape(batch, seq, d_model)


def init_params(key, d_model, d_ff, dtype=jnp.float32):
    """Deterministic init mimicking torch.nn.Linear (uniform +-1/sqrt(fan_in)).

    Returns weights already transposed to (in_features, out_features).
    """
    k1, k2, k3, k4 = jax.random.split(key, 4)
    bound1 = 1.0 / (d_model ** 0.5)
    bound2 = 1.0 / (d_ff ** 0.5)
    w1 = jax.random.uniform(k1, (d_model, d_ff), dtype, -bound1, bound1)
    b1 = jax.random.uniform(k2, (d_ff,), dtype, -bound1, bound1)
    w2 = jax.random.uniform(k3, (d_ff, d_model), dtype, -bound2, bound2)
    b2 = jax.random.uniform(k4, (d_model,), dtype, -bound2, bound2)
    return w1, b1, w2, b2


def feed_forward_ref(x, w1, b1, w2, b2, compute_dtype=jnp.float32):
    """Pure-JAX reference at matched matmul precision (f32 accumulation)."""
    xc = x.astype(compute_dtype)
    w1c = w1.astype(compute_dtype)
    w2c = w2.astype(compute_dtype)
    h = jnp.einsum("bsd,df->bsf", xc, w1c,
                   preferred_element_type=jnp.float32) + b1
    h = jnp.maximum(h, 0.0)
    out = jnp.einsum("bsf,fd->bsd", h.astype(compute_dtype), w2c,
                     preferred_element_type=jnp.float32) + b2
    return out.astype(x.dtype)


if __name__ == "__main__":
    # Small but lane-dense shapes (d_model, d_ff multiples of 128).
    batch, seq, d_model, d_ff = 2, 8, 256, 512

    key = jax.random.PRNGKey(0)
    kx, kp = jax.random.split(key)
    x = jax.random.normal(kx, (batch, seq, d_model), jnp.float32)
    w1, b1, w2, b2 = init_params(kp, d_model, d_ff)

    # 1) f32-matmul path: tight correctness vs f32 reference.
    out_f32 = jax.block_until_ready(
        feed_forward(x, w1, b1, w2, b2, tm=128, tf=512,
                     compute_dtype=jnp.float32))
    ref_f32 = feed_forward_ref(x, w1, b1, w2, b2, compute_dtype=jnp.float32)
    assert out_f32.shape == (batch, seq, d_model)
    assert jnp.allclose(out_f32, ref_f32, atol=1e-3, rtol=1e-3)

    # 2) bf16-matmul perf config (exercises the d_ff reduction accumulator,
    #    grid_f = 2) vs a matched-precision reference.
    out_bf16 = jax.block_until_ready(
        feed_forward(x, w1, b1, w2, b2, tm=128, tf=256,
                     compute_dtype=jnp.bfloat16))
    ref_bf16 = feed_forward_ref(x, w1, b1, w2, b2, compute_dtype=jnp.bfloat16)
    assert out_bf16.shape == (batch, seq, d_model)
    assert jnp.allclose(out_bf16, ref_bf16, atol=2e-2, rtol=2e-2)

    print("KERNEL_OK")
</pallas_src>

<mosaic_0001>
module attributes {stable_mosaic.version = 11 : i64} {
  func.func @_ffn_kernel(%arg0: i32, %arg1: i32, %arg2: memref<128x256xf32, #tpu.memory_space<vmem>>, %arg3: memref<256x512xf32, #tpu.memory_space<vmem>>, %arg4: memref<1x512xf32, #tpu.memory_space<vmem>>, %arg5: memref<512x256xf32, #tpu.memory_space<vmem>>, %arg6: memref<1x256xf32, #tpu.memory_space<vmem>>, %arg7: memref<128x256xf32, #tpu.memory_space<vmem>>, %arg8: memref<128x256xf32, #tpu.memory_space<vmem>>) attributes {dimension_semantics = [#tpu.dimension_semantics<parallel>, #tpu.dimension_semantics<arbitrary>], iteration_bounds = array<i64: 1, 1>, scalar_prefetch = 0 : i64, scratch_operands = 1 : i64, tpu.core_type = #tpu.core_type<tc>, window_params = [{transform_indices = @transform_0, window_bounds = array<i64: 128, 256>}, {transform_indices = @transform_1, window_bounds = array<i64: 256, 512>}, {transform_indices = @transform_2, window_bounds = array<i64: 1, 512>}, {transform_indices = @transform_3, window_bounds = array<i64: 512, 256>}, {pipeline_mode = #tpu.pipeline_mode<synchronous>, transform_indices = @transform_4, window_bounds = array<i64: 1, 256>}, {transform_indices = @transform_5, window_bounds = array<i64: 128, 256>}]} {
    %c0_i32 = arith.constant 0 : i32
    %0 = arith.cmpi eq, %arg1, %c0_i32 : i32
    %1 = arith.extui %0 : i1 to i32
    %c0_i32_0 = arith.constant 0 : i32
    %2 = arith.cmpi ne, %1, %c0_i32_0 : i32
    scf.if %2 {
      %cst_16 = arith.constant 0.000000e+00 : f32
      %19 = vector.broadcast %cst_16 : f32 to vector<128x256xf32>
      %c0_17 = arith.constant 0 : index
      %c0_18 = arith.constant 0 : index
      %20 = vector.load %arg8[%c0_17, %c0_18] : memref<128x256xf32, #tpu.memory_space<vmem>>, vector<128x256xf32>
      tpu.vector_store %arg8[%c0_17, %c0_18], %19 {strides = array<i32>} : memref<128x256xf32, #tpu.memory_space<vmem>>, vector<128x256xf32>,
    } else {
    }
    %c0 = arith.constant 0 : index
    %c0_1 = arith.constant 0 : index
    %3 = vector.load %arg2[%c0, %c0_1] : memref<128x256xf32, #tpu.memory_space<vmem>>, vector<128x256xf32>
    %c0_2 = arith.constant 0 : index
    %c0_3 = arith.constant 0 : index
    %4 = vector.load %arg3[%c0_2, %c0_3] : memref<256x512xf32, #tpu.memory_space<vmem>>, vector<256x512xf32>
    %cst = arith.constant dense<0.000000e+00> : vector<128x512xf32>
    %5 = tpu.matmul %3, %4, %cst {dimension_numbers = #tpu.dot_dimension_numbers<[1], [0], [0], [1], [0, 0, 1, 1], [], []>} : vector<128x256xf32>, vector<256x512xf32>, vector<128x512xf32> -> vector<128x512xf32>
    %c0_4 = arith.constant 0 : index
    %c0_5 = arith.constant 0 : index
    %6 = vector.load %arg4[%c0_4, %c0_5] : memref<1x512xf32, #tpu.memory_space<vmem>>, vector<1x512xf32>
    %7 = vector.broadcast %6 : vector<1x512xf32> to vector<128x512xf32>
    %8 = arith.addf %5, %7 : vector<128x512xf32>
    %cst_6 = arith.constant 0.000000e+00 : f32
    %9 = vector.broadcast %cst_6 : f32 to vector<128x512xf32>
    %10 = arith.maximumf %8, %9 : vector<128x512xf32>
    %c0_7 = arith.constant 0 : index
    %c0_8 = arith.constant 0 : index
    %11 = vector.load %arg8[%c0_7, %c0_8] : memref<128x256xf32, #tpu.memory_space<vmem>>, vector<128x256xf32>
    %c0_9 = arith.constant 0 : index
    %c0_10 = arith.constant 0 : index
    %12 = vector.load %arg5[%c0_9, %c0_10] : memref<512x256xf32, #tpu.memory_space<vmem>>, vector<512x256xf32>
    %cst_11 = arith.constant dense<0.000000e+00> : vector<128x256xf32>
    %13 = tpu.matmul %10, %12, %cst_11 {dimension_numbers = #tpu.dot_dimension_numbers<[1], [0], [0], [1], [0, 0, 1, 1], [], []>} : vector<128x512xf32>, vector<512x256xf32>, vector<128x256xf32> -> vector<128x256xf32>
    %14 = arith.addf %11, %13 : vector<128x256xf32>
    %c0_12 = arith.constant 0 : index
    %c0_13 = arith.constant 0 : index
    %15 = vector.load %arg8[%c0_12, %c0_13] : memref<128x256xf32, #tpu.memory_space<vmem>>, vector<128x256xf32>
    tpu.vector_store %arg8[%c0_12, %c0_13], %14 {strides = array<i32>} : memref<128x256xf32, #tpu.memory_space<vmem>>, vector<128x256xf32>,
    %c0_i32_14 = arith.constant 0 : i32
    %16 = arith.cmpi eq, %arg1, %c0_i32_14 : i32
    %17 = arith.extui %16 : i1 to i32
    %c0_i32_15 = arith.constant 0 : i32
    %18 = arith.cmpi ne, %17, %c0_i32_15 : i32
    scf.if %18 {
      %c0_16 = arith.constant 0 : index
      %c0_17 = arith.constant 0 : index
      %19 = vector.load %arg8[%c0_16, %c0_17] : memref<128x256xf32, #tpu.memory_space<vmem>>, vector<128x256xf32>
      %c0_18 = arith.constant 0 : index
      %c0_19 = arith.constant 0 : index
      %20 = vector.load %arg6[%c0_18, %c0_19] : memref<1x256xf32, #tpu.memory_space<vmem>>, vector<1x256xf32>
      %21 = vector.broadcast %20 : vector<1x256xf32> to vector<128x256xf32>
      %22 = arith.addf %19, %21 : vector<128x256xf32>
      %c0_20 = arith.constant 0 : index
      %c0_21 = arith.constant 0 : index
      %23 = vector.load %arg7[%c0_20, %c0_21] : memref<128x256xf32, #tpu.memory_space<vmem>>, vector<128x256xf32>
      tpu.vector_store %arg7[%c0_20, %c0_21], %22 {strides = array<i32>} : memref<128x256xf32, #tpu.memory_space<vmem>>, vector<128x256xf32>,
    } else {
    }
    return
  }
  func.func @transform_0(%arg0: i32, %arg1: i32) -> (i32, i32) {
    %c0_i32 = arith.constant 0 : i32
    %c0_i32_0 = arith.constant 0 : i32
    return %arg0, %c0_i32 : i32, i32
  }
  func.func @transform_1(%arg0: i32, %arg1: i32) -> (i32, i32) {
    %c0_i32 = arith.constant 0 : i32
    %c0_i32_0 = arith.constant 0 : i32
    return %c0_i32, %arg1 : i32, i32
  }
  func.func @transform_2(%arg0: i32, %arg1: i32) -> (i32, i32) {
    %c0_i32 = arith.constant 0 : i32
    %c0_i32_0 = arith.constant 0 : i32
    return %c0_i32, %arg1 : i32, i32
  }
  func.func @transform_3(%arg0: i32, %arg1: i32) -> (i32, i32) {
    %c0_i32 = arith.constant 0 : i32
    %c0_i32_0 = arith.constant 0 : i32
    return %arg1, %c0_i32 : i32, i32
  }
  func.func @transform_4(%arg0: i32, %arg1: i32) -> (i32, i32) {
    %c0_i32 = arith.constant 0 : i32
    %c0_i32_0 = arith.constant 0 : i32
    %c0_i32_1 = arith.constant 0 : i32
    return %c0_i32, %c0_i32_0 : i32, i32
  }
  func.func @transform_5(%arg0: i32, %arg1: i32) -> (i32, i32) {
    %c0_i32 = arith.constant 0 : i32
    %c0_i32_0 = arith.constant 0 : i32
    return %arg0, %c0_i32 : i32, i32
  }
}

</mosaic_0001>

<llo_original>
// kernel: feed_forward.1
$region0: #{feed_forward.1}
  #allocation0 [shape = 'u32[]', space=smem, size = 0x4, offset = 0x4, fixed_abs, tag = 'smem constant byte address 0x4 - core index']
  #allocation1 [shape = 'u32[144,128]{1,0:T(1,128)}', space=vmem, size = 0x12000, scoped, tag = 'internal scratch']
  #allocation2 [shape = 'f32[128,256]{1,0:T(8,128)}', space=vmem, size = 0x20000, scoped, tag = 'scratch operand']
  %s0 = inlined_call_operand.vmem [shape: f32[128,256], index: 0, kind: input, shape index: {}]
  %s1 = inlined_call_operand.hbm [shape: f32[256,512], index: 1, kind: input, shape index: {}]
  %s2 = inlined_call_operand.vmem [shape: f32[1,512], index: 2, kind: input, shape index: {}]
  %s3 = inlined_call_operand.hbm [shape: f32[512,256], index: 3, kind: input, shape index: {}]
  %s4 = inlined_call_operand.vmem [shape: f32[1,256], index: 4, kind: input, shape index: {}]
  %s5 = inlined_call_operand.vmem [shape: f32[128,256], index: 5, kind: output, shape index: {}]
  %s6 = sld [smem:[#allocation0]]
  $region46: #{feed_forward.1} parent=0
    _
  %s8 = ssub.s32 1, %s6
  %s9 = scalar_select 0, %s8, %s6
  $region1: #{feed_forward.1} parent=0
    #allocation3 [shape = 'u8[524288]{0}', space=vmem, size = 0x80000, scoped, tag = 'input window, operand 1, single buffered']
    #allocation4 [shape = 's32[1]{0}', space=sflag, size = 0x4, scoped, tag = 'scoped memory for feed_forward.1']
    #allocation5 [shape = 'u8[524288]{0}', space=vmem, size = 0x80000, scoped, tag = 'input window, operand 3, single buffered']
    #allocation6 [shape = 's32[1]{0}', space=sflag, size = 0x4, scoped, tag = 'scoped memory for feed_forward.1']
    %10 = vsyncpa [#allocation4], 0
    %11 = vsyncpa [#allocation6], 0
    // Predicated region
    $region2: #{feed_forward.1} parent=1 // pred_check
      _
    $region3: #{feed_forward.1} parent=1 // pred_check_branch
      %13 = sbr.rel (0) target = $region5
    $region4: #{feed_forward.1} parent=1 // pred_region
      _
    $region5: #{feed_forward.1} parent=1 // pred_fallthru
      _
    // Predicated region
    $region6: #{feed_forward.1} parent=1 // pred_check
      _
    $region7: #{feed_forward.1} parent=1 // pred_check_branch
      %15 = sbr.rel (0) target = $region9
    $region8: #{feed_forward.1} parent=1 // pred_region
      %s17 = ssub.s32 16384, 16384
      %18 = vsyncadd [#allocation4], %s17
      %s19 = sshll.u32 [#allocation3], 4
      %s20 = int_to_ptr.vmem [resolvable:$true] %s19
      %25 = dma.hbm_to_vmem [thread:$0]  %s1, 16384, %s20, [#allocation4], 512, 512, 32
    $region9: #{feed_forward.1} parent=1 // pred_fallthru
      _
    // Predicated region
    $region10: #{feed_forward.1} parent=1 // pred_check
      _
    $region11: #{feed_forward.1} parent=1 // pred_check_branch
      %27 = sbr.rel (0) target = $region13
    $region12: #{feed_forward.1} parent=1 // pred_region
      _
    $region13: #{feed_forward.1} parent=1 // pred_fallthru
      _
    // Predicated region
    $region14: #{feed_forward.1} parent=1 // pred_check
      _
    $region15: #{feed_forward.1} parent=1 // pred_check_branch
      %29 = sbr.rel (0) target = $region17
    $region16: #{feed_forward.1} parent=1 // pred_region
      %s31 = ssub.s32 16384, 16384
      %32 = vsyncadd [#allocation6], %s31
      %s33 = sshll.u32 [#allocation5], 4
      %s34 = int_to_ptr.vmem [resolvable:$true] %s33
      %39 = dma.hbm_to_vmem [thread:$0]  %s3, 16384, %s34, [#allocation6], 256, 256, 16
    $region17: #{feed_forward.1} parent=1 // pred_fallthru
      _
    // Predicated region
    $region18: #{feed_forward.1} parent=1 // pred_check
      _
    $region19: #{feed_forward.1} parent=1 // pred_check_branch
      %41 = sbr.rel (0) target = $region21
    $region20: #{feed_forward.1} parent=1 // pred_region
      _
    $region21: #{feed_forward.1} parent=1 // pred_fallthru
      _
    // Predicated region
    $region22: #{feed_forward.1} parent=1 // pred_check
      _
    $region23: #{feed_forward.1} parent=1 // pred_check_branch
      %43 = sbr.rel (0) target = $region25
    $region24: #{feed_forward.1} parent=1 // pred_region
      %44 = dma.done [#allocation4], 16384
    $region25: #{feed_forward.1} parent=1 // pred_fallthru
      _
    // Predicated region
    $region26: #{feed_forward.1} parent=1 // pred_check
      _
    $region27: #{feed_forward.1} parent=1 // pred_check_branch
      %46 = sbr.rel (0) target = $region29
    $region28: #{feed_forward.1} parent=1 // pred_region
      %47 = dma.done [#allocation6], 16384
    $region29: #{feed_forward.1} parent=1 // pred_fallthru
      _
    %p48 = scmp.eq.s32.totalorder 0, 0
    // Predicated region
    $region30: #{feed_forward.1} parent=1 // pred_check
      %p49 = pneg %p48
    $region31: #{feed_forward.1} parent=1 // pred_check_branch
      %51 = sbr.rel (%p49) target = $region33
    $region32: #{feed_forward.1} parent=1 // pred_region
      %52 = vst [vmem:[#allocation2] sm:$0xff] 0.0
      %53 = vst [vmem:[#allocation2 + $0x8] sm:$0xff] 0.0
      %54 = vst [vmem:[#allocation2 + $0x10] sm:$0xff] 0.0
      %55 = vst [vmem:[#allocation2 + $0x18] sm:$0xff] 0.0
      %56 = vst [vmem:[#allocation2 + $0x20] sm:$0xff] 0.0
      %57 = vst [vmem:[#allocation2 + $0x28] sm:$0xff] 0.0
      %58 = vst [vmem:[#allocation2 + $0x30] sm:$0xff] 0.0
      %59 = vst [vmem:[#allocation2 + $0x38] sm:$0xff] 0.0
      %60 = vst [vmem:[#allocation2 + $0x40] sm:$0xff] 0.0
      %61 = vst [vmem:[#allocation2 + $0x48] sm:$0xff] 0.0
      %62 = vst [vmem:[#allocation2 + $0x50] sm:$0xff] 0.0
      %63 = vst [vmem:[#allocation2 + $0x58] sm:$0xff] 0.0
      %64 = vst [vmem:[#allocation2 + $0x60] sm:$0xff] 0.0
      %65 = vst [vmem:[#allocation2 + $0x68] sm:$0xff] 0.0
      %66 = vst [vmem:[#allocation2 + $0x70] sm:$0xff] 0.0
      %67 = vst [vmem:[#allocation2 + $0x78] sm:$0xff] 0.0
      %68 = vst [vmem:[#allocation2 + $0x80] sm:$0xff] 0.0
      %69 = vst [vmem:[#allocation2 + $0x88] sm:$0xff] 0.0
      %70 = vst [vmem:[#allocation2 + $0x90] sm:$0xff] 0.0
      %71 = vst [vmem:[#allocation2 + $0x98] sm:$0xff] 0.0
      %72 = vst [vmem:[#allocation2 + $0xa0] sm:$0xff] 0.0
      %73 = vst [vmem:[#allocation2 + $0xa8] sm:$0xff] 0.0
      %74 = vst [vmem:[#allocation2 + $0xb0] sm:$0xff] 0.0
      %75 = vst [vmem:[#allocation2 + $0xb8] sm:$0xff] 0.0
      %76 = vst [vmem:[#allocation2 + $0xc0] sm:$0xff] 0.0
      %77 = vst [vmem:[#allocation2 + $0xc8] sm:$0xff] 0.0
      %78 = vst [vmem:[#allocation2 + $0xd0] sm:$0xff] 0.0
      %79 = vst [vmem:[#allocation2 + $0xd8] sm:$0xff] 0.0
      %80 = vst [vmem:[#allocation2 + $0xe0] sm:$0xff] 0.0
      %81 = vst [vmem:[#allocation2 + $0xe8] sm:$0xff] 0.0
      %82 = vst [vmem:[#allocation2 + $0xf0] sm:$0xff] 0.0
      %83 = vst [vmem:[#allocation2 + $0xf8] sm:$0xff] 0.0
    $region33: #{feed_forward.1} parent=1 // pred_fallthru
      _
    %v84 = vld [vmem:[%s0] sm:$0xff]
    %v85 = vld [vmem:[%s0 + $0x8] sm:$0xff]
    %v86 = vld [vmem:[%s0 + $0x10] sm:$0xff]
    %v87 = vld [vmem:[%s0 + $0x18] sm:$0xff]
    %v88 = vld [vmem:[%s0 + $0x20] sm:$0xff]
    %v89 = vld [vmem:[%s0 + $0x28] sm:$0xff]
    %v90 = vld [vmem:[%s0 + $0x30] sm:$0xff]
    %v91 = vld [vmem:[%s0 + $0x38] sm:$0xff]
    %v92 = vld [vmem:[%s0 + $0x40] sm:$0xff]
    %v93 = vld [vmem:[%s0 + $0x48] sm:$0xff]
    %v94 = vld [vmem:[%s0 + $0x50] sm:$0xff]
    %v95 = vld [vmem:[%s0 + $0x58] sm:$0xff]
    %v96 = vld [vmem:[%s0 + $0x60] sm:$0xff]
    %v97 = vld [vmem:[%s0 + $0x68] sm:$0xff]
    %v98 = vld [vmem:[%s0 + $0x70] sm:$0xff]
    %v99 = vld [vmem:[%s0 + $0x78] sm:$0xff]
    %v100 = vld [vmem:[%s0 + $0x80] sm:$0xff]
    %v101 = vld [vmem:[%s0 + $0x88] sm:$0xff]
    %v102 = vld [vmem:[%s0 + $0x90] sm:$0xff]
    %v103 = vld [vmem:[%s0 + $0x98] sm:$0xff]
    %v104 = vld [vmem:[%s0 + $0xa0] sm:$0xff]
    %v105 = vld [vmem:[%s0 + $0xa8] sm:$0xff]
    %v106 = vld [vmem:[%s0 + $0xb0] sm:$0xff]
    %v107 = vld [vmem:[%s0 + $0xb8] sm:$0xff]
    %v108 = vld [vmem:[%s0 + $0xc0] sm:$0xff]
    %v109 = vld [vmem:[%s0 + $0xc8] sm:$0xff]
    %v110 = vld [vmem:[%s0 + $0xd0] sm:$0xff]
    %v111 = vld [vmem:[%s0 + $0xd8] sm:$0xff]
    %v112 = vld [vmem:[%s0 + $0xe0] sm:$0xff]
    %v113 = vld [vmem:[%s0 + $0xe8] sm:$0xff]
    %v114 = vld [vmem:[%s0 + $0xf0] sm:$0xff]
    %v115 = vld [vmem:[%s0 + $0xf8] sm:$0xff]
    %v116 = vld [vmem:[#allocation3] sm:$0xff]
    %v117 = vld [vmem:[#allocation3 + $0x8] sm:$0xff]
    %v118 = vld [vmem:[#allocation3 + $0x10] sm:$0xff]
    %v119 = vld [vmem:[#allocation3 + $0x18] sm:$0xff]
    %v120 = vld [vmem:[#allocation3 + $0x20] sm:$0xff]
    %v121 = vld [vmem:[#allocation3 + $0x28] sm:$0xff]
    %v122 = vld [vmem:[#allocation3 + $0x30] sm:$0xff]
    %v123 = vld [vmem:[#allocation3 + $0x38] sm:$0xff]
    %v124 = vld [vmem:[#allocation3 + $0x40] sm:$0xff]
    %v125 = vld [vmem:[#allocation3 + $0x48] sm:$0xff]
    %v126 = vld [vmem:[#allocation3 + $0x50] sm:$0xff]
    %v127 = vld [vmem:[#allocation3 + $0x58] sm:$0xff]
    %v128 = vld [vmem:[#allocation3 + $0x60] sm:$0xff]
    %v129 = vld [vmem:[#allocation3 + $0x68] sm:$0xff]
    %v130 = vld [vmem:[#allocation3 + $0x70] sm:$0xff]
    %v131 = vld [vmem:[#allocation3 + $0x78] sm:$0xff]
    %v132 = vld [vmem:[#allocation3 + $0x80] sm:$0xff]
    %v133 = vld [vmem:[#allocation3 + $0x88] sm:$0xff]
    %v134 = vld [vmem:[#allocation3 + $0x90] sm:$0xff]
    %v135 = vld [vmem:[#allocation3 + $0x98] sm:$0xff]
    %v136 = vld [vmem:[#allocation3 + $0xa0] sm:$0xff]
    %v137 = vld [vmem:[#allocation3 + $0xa8] sm:$0xff]
    %v138 = vld [vmem:[#allocation3 + $0xb0] sm:$0xff]
    %v139 = vld [vmem:[#allocation3 + $0xb8] sm:$0xff]
    %v140 = vld [vmem:[#allocation3 + $0xc0] sm:$0xff]
    %v141 = vld [vmem:[#allocation3 + $0xc8] sm:$0xff]
    %v142 = vld [vmem:[#allocation3 + $0xd0] sm:$0xff]
    %v143 = vld [vmem:[#allocation3 + $0xd8] sm:$0xff]
    %v144 = vld [vmem:[#allocation3 + $0xe0] sm:$0xff]
    %v145 = vld [vmem:[#allocation3 + $0xe8] sm:$0xff]
    %v146 = vld [vmem:[#allocation3 + $0xf0] sm:$0xff]
    %v147 = vld [vmem:[#allocation3 + $0xf8] sm:$0xff]
    %v148 = vld [vmem:[#allocation3 + $0x100] sm:$0xff]
    %v149 = vld [vmem:[#allocation3 + $0x108] sm:$0xff]
    %v150 = vld [vmem:[#allocation3 + $0x110] sm:$0xff]
    %v151 = vld [vmem:[#allocation3 + $0x118] sm:$0xff]
    %v152 = vld [vmem:[#allocation3 + $0x120] sm:$0xff]
    %v153 = vld [vmem:[#allocation3 + $0x128] sm:$0xff]
    %v154 = vld [vmem:[#allocation3 + $0x130] sm:$0xff]
    %v155 = vld [vmem:[#allocation3 + $0x138] sm:$0xff]
    %v156 = vld [vmem:[#allocation3 + $0x140] sm:$0xff]
    %v157 = vld [vmem:[#allocation3 + $0x148] sm:$0xff]
    %v158 = vld [vmem:[#allocation3 + $0x150] sm:$0xff]
    %v159 = vld [vmem:[#allocation3 + $0x158] sm:$0xff]
    %v160 = vld [vmem:[#allocation3 + $0x160] sm:$0xff]
    %v161 = vld [vmem:[#allocation3 + $0x168] sm:$0xff]
    %v162 = vld [vmem:[#allocation3 + $0x170] sm:$0xff]
    %v163 = vld [vmem:[#allocation3 + $0x178] sm:$0xff]
    %v164 = vld [vmem:[#allocation3 + $0x180] sm:$0xff]
    %v165 = vld [vmem:[#allocation3 + $0x188] sm:$0xff]
    %v166 = vld [vmem:[#allocation3 + $0x190] sm:$0xff]
    %v167 = vld [vmem:[#allocation3 + $0x198] sm:$0xff]
    %v168 = vld [vmem:[#allocation3 + $0x1a0] sm:$0xff]
    %v169 = vld [vmem:[#allocation3 + $0x1a8] sm:$0xff]
    %v170 = vld [vmem:[#allocation3 + $0x1b0] sm:$0xff]
    %v171 = vld [vmem:[#allocation3 + $0x1b8] sm:$0xff]
    %v172 = vld [vmem:[#allocation3 + $0x1c0] sm:$0xff]
    %v173 = vld [vmem:[#allocation3 + $0x1c8] sm:$0xff]
    %v174 = vld [vmem:[#allocation3 + $0x1d0] sm:$0xff]
    %v175 = vld [vmem:[#allocation3 + $0x1d8] sm:$0xff]
    %v176 = vld [vmem:[#allocation3 + $0x1e0] sm:$0xff]
    %v177 = vld [vmem:[#allocation3 + $0x1e8] sm:$0xff]
    %v178 = vld [vmem:[#allocation3 + $0x1f0] sm:$0xff]
    %v179 = vld [vmem:[#allocation3 + $0x1f8] sm:$0xff]
    %v180 = vld [vmem:[#allocation3 + $0x200] sm:$0xff]
    %v181 = vld [vmem:[#allocation3 + $0x208] sm:$0xff]
    %v182 = vld [vmem:[#allocation3 + $0x210] sm:$0xff]
    %v183 = vld [vmem:[#allocation3 + $0x218] sm:$0xff]
    %v184 = vld [vmem:[#allocation3 + $0x220] sm:$0xff]
    %v185 = vld [vmem:[#allocation3 + $0x228] sm:$0xff]
    %v186 = vld [vmem:[#allocation3 + $0x230] sm:$0xff]
    %v187 = vld [vmem:[#allocation3 + $0x238] sm:$0xff]
    %v188 = vld [vmem:[#allocation3 + $0x240] sm:$0xff]
    %v189 = vld [vmem:[#allocation3 + $0x248] sm:$0xff]
    %v190 = vld [vmem:[#allocation3 + $0x250] sm:$0xff]
    %v191 = vld [vmem:[#allocation3 + $0x258] sm:$0xff]
    %v192 = vld [vmem:[#allocation3 + $0x260] sm:$0xff]
    %v193 = vld [vmem:[#allocation3 + $0x268] sm:$0xff]
    %v194 = vld [vmem:[#allocation3 + $0x270] sm:$0xff]
    %v195 = vld [vmem:[#allocation3 + $0x278] sm:$0xff]
    %v196 = vld [vmem:[#allocation3 + $0x280] sm:$0xff]
    %v197 = vld [vmem:[#allocation3 + $0x288] sm:$0xff]
    %v198 = vld [vmem:[#allocation3 + $0x290] sm:$0xff]
    %v199 = vld [vmem:[#allocation3 + $0x298] sm:$0xff]
    %v200 = vld [vmem:[#allocation3 + $0x2a0] sm:$0xff]
    %v201 = vld [vmem:[#allocation3 + $0x2a8] sm:$0xff]
    %v202 = vld [vmem:[#allocation3 + $0x2b0] sm:$0xff]
    %v203 = vld [vmem:[#allocation3 + $0x2b8] sm:$0xff]
    %v204 = vld [vmem:[#allocation3 + $0x2c0] sm:$0xff]
    %v205 = vld [vmem:[#allocation3 + $0x2c8] sm:$0xff]
    %v206 = vld [vmem:[#allocation3 + $0x2d0] sm:$0xff]
    %v207 = vld [vmem:[#allocation3 + $0x2d8] sm:$0xff]
    %v208 = vld [vmem:[#allocation3 + $0x2e0] sm:$0xff]
    %v209 = vld [vmem:[#allocation3 + $0x2e8] sm:$0xff]
    %v210 = vld [vmem:[#allocation3 + $0x2f0] sm:$0xff]
    %v211 = vld [vmem:[#allocation3 + $0x2f8] sm:$0xff]
    %v212 = vld [vmem:[#allocation3 + $0x300] sm:$0xff]
    %v213 = vld [vmem:[#allocation3 + $0x308] sm:$0xff]
    %v214 = vld [vmem:[#allocation3 + $0x310] sm:$0xff]
    %v215 = vld [vmem:[#allocation3 + $0x318] sm:$0xff]
    %v216 = vld [vmem:[#allocation3 + $0x320] sm:$0xff]
    %v217 = vld [vmem:[#allocation3 + $0x328] sm:$0xff]
    %v218 = vld [vmem:[#allocation3 + $0x330] sm:$0xff]
    %v219 = vld [vmem:[#allocation3 + $0x338] sm:$0xff]
    %v220 = vld [vmem:[#allocation3 + $0x340] sm:$0xff]
    %v221 = vld [vmem:[#allocation3 + $0x348] sm:$0xff]
    %v222 = vld [vmem:[#allocation3 + $0x350] sm:$0xff]
    %v223 = vld [vmem:[#allocation3 + $0x358] sm:$0xff]
    %v224 = vld [vmem:[#allocation3 + $0x360] sm:$0xff]
    %v225 = vld [vmem:[#allocation3 + $0x368] sm:$0xff]
    %v226 = vld [vmem:[#allocation3 + $0x370] sm:$0xff]
    %v227 = vld [vmem:[#allocation3 + $0x378] sm:$0xff]
    %v228 = vld [vmem:[#allocation3 + $0x380] sm:$0xff]
    %v229 = vld [vmem:[#allocation3 + $0x388] sm:$0xff]
    %v230 = vld [vmem:[#allocation3 + $0x390] sm:$0xff]
    %v231 = vld [vmem:[#allocation3 + $0x398] sm:$0xff]
    %v232 = vld [vmem:[#allocation3 + $0x3a0] sm:$0xff]
    %v233 = vld [vmem:[#allocation3 + $0x3a8] sm:$0xff]
    %v234 = vld [vmem:[#allocation3 + $0x3b0] sm:$0xff]
    %v235 = vld [vmem:[#allocation3 + $0x3b8] sm:$0xff]
    %v236 = vld [vmem:[#allocation3 + $0x3c0] sm:$0xff]
    %v237 = vld [vmem:[#allocation3 + $0x3c8] sm:$0xff]
    %v238 = vld [vmem:[#allocation3 + $0x3d0] sm:$0xff]
    %v239 = vld [vmem:[#allocation3 + $0x3d8] sm:$0xff]
    %v240 = vld [vmem:[#allocation3 + $0x3e0] sm:$0xff]
    %v241 = vld [vmem:[#allocation3 + $0x3e8] sm:$0xff]
    %v242 = vld [vmem:[#allocation3 + $0x3f0] sm:$0xff]
    %v243 = vld [vmem:[#allocation3 + $0x3f8] sm:$0xff]
    %v244 = vld [vmem:[%s2] sm:$0xf]
    %v246 = vlaneseq
    %v247 = vshrl.u32 %v246, 7
    %v248 = vsub.s32 0, %v247
    %v249 = vrot.slane %v244, %v248
    %v250 = vlaneseq
    %v251 = vshrl.u32 %v250, 7
    %v252 = vsub.s32 1, %v251
    %v253 = vrot.slane %v244, %v252
    %v254 = vlaneseq
    %v255 = vshrl.u32 %v254, 7
    %v256 = vsub.s32 2, %v255
    %v257 = vrot.slane %v244, %v256
    %v258 = vlaneseq
    %v259 = vshrl.u32 %v258, 7
    %v260 = vsub.s32 3, %v259
    %v261 = vrot.slane %v244, %v260
    %266 = vmatprep.subr.mxu0 %v117
    %267 = vmatpush1.msra.mxu0 %v116
    %268 = vmatprep.subr.mxu0 %v121
    %269 = vmatpush1.msra.mxu0 %v120
    %270 = vmatprep.subr.mxu0 %v125
    %271 = vmatpush1.msra.mxu0 %v124
    %272 = vmatprep.subr.mxu0 %v129
    %273 = vmatpush1.msra.mxu0 %v128
    %274 = vmatprep.subr.mxu0 %v133
    %275 = vmatpush1.msra.mxu0 %v132
    %276 = vmatprep.subr.mxu0 %v137
    %277 = vmatpush1.msra.mxu0 %v136
    %278 = vmatprep.subr.mxu0 %v141
    %279 = vmatpush1.msra.mxu0 %v140
    %280 = vmatprep.subr.mxu0 %v145
    %281 = vmatpush1.msra.mxu0 %v144
    %282 = vmatprep.subr.mxu0 %v149
    %283 = vmatpush1.msra.mxu0 %v148
    %284 = vmatprep.subr.mxu0 %v153
    %285 = vmatpush1.msra.mxu0 %v152
    %286 = vmatprep.subr.mxu0 %v157
    %287 = vmatpush1.msra.mxu0 %v156
    %288 = vmatprep.subr.mxu0 %v161
    %289 = vmatpush1.msra.mxu0 %v160
    %290 = vmatprep.subr.mxu0 %v165
    %291 = vmatpush1.msra.mxu0 %v164
    %292 = vmatprep.subr.mxu0 %v169
    %293 = vmatpush1.msra.mxu0 %v168
    %294 = vmatprep.subr.mxu0 %v173
    %295 = vmatpush1.msra.mxu0 %v172
    %296 = vmatprep.subr.mxu0 %v177
    %297 = vmatpush1.msra.mxu0 %v176
    %298 = vmatprep.subr.mxu0 %v181
    %299 = vmatpush1.msra.mxu0 %v180
    %300 = vmatprep.subr.mxu0 %v185
    %301 = vmatpush1.msra.mxu0 %v184
    %302 = vmatprep.subr.mxu0 %v189
    %303 = vmatpush1.msra.mxu0 %v188
    %304 = vmatprep.subr.mxu0 %v193
    %305 = vmatpush1.msra.mxu0 %v192
    %306 = vmatprep.subr.mxu0 %v197
    %307 = vmatpush1.msra.mxu0 %v196
    %308 = vmatprep.subr.mxu0 %v201
    %309 = vmatpush1.msra.mxu0 %v200
    %310 = vmatprep.subr.mxu0 %v205
    %311 = vmatpush1.msra.mxu0 %v204
    %312 = vmatprep.subr.mxu0 %v209
    %313 = vmatpush1.msra.mxu0 %v208
    %314 = vmatprep.subr.mxu0 %v213
    %315 = vmatpush1.msra.mxu0 %v212
    %316 = vmatprep.subr.mxu0 %v217
    %317 = vmatpush1.msra.mxu0 %v216
    %318 = vmatprep.subr.mxu0 %v221
    %319 = vmatpush1.msra.mxu0 %v220
    %320 = vmatprep.subr.mxu0 %v225
    %321 = vmatpush1.msra.mxu0 %v224
    %322 = vmatprep.subr.mxu0 %v229
    %323 = vmatpush1.msra.mxu0 %v228
    %324 = vmatprep.subr.mxu0 %v233
    %325 = vmatpush1.msra.mxu0 %v232
    %326 = vmatprep.subr.mxu0 %v237
    %327 = vmatpush1.msra.mxu0 %v236
    %328 = vmatprep.subr.mxu0 %v241
    %329 = vmatpush1.msra.mxu0 %v240
    %330 = vmatprep.mubr.f32.mxu0 %v85
    %331 = vmatmul.mubr.f32.gmra.mrb[0].mxu0 %v84
    %v332 = vpop.f32.mrb[0].mxu0
    %v333 = vadd.f32 %v249, %v332
    %v334 = vpop.f32.mrb[0].mxu0
    %v335 = vadd.f32 %v253, %v334
    %336 = vmatprep.mubr.f32.mxu0 %v87
    %337 = vmatmul.mubr.f32.gmra.mrb[0].mxu0 %v86
    %v338 = vpop.f32.mrb[0].mxu0
    %v339 = vadd.f32 %v249, %v338
    %v340 = vpop.f32.mrb[0].mxu0
    %v341 = vadd.f32 %v253, %v340
    %342 = vmatprep.mubr.f32.mxu0 %v89
    %343 = vmatmul.mubr.f32.gmra.mrb[0].mxu0 %v88
    %v344 = vpop.f32.mrb[0].mxu0
    %v345 = vadd.f32 %v249, %v344
    %v346 = vpop.f32.mrb[0].mxu0
    %v347 = vadd.f32 %v253, %v346
    %348 = vmatprep.mubr.f32.mxu0 %v91
    %349 = vmatmul.mubr.f32.gmra.mrb[0].mxu0 %v90
    %v350 = vpop.f32.mrb[0].mxu0
    %v351 = vadd.f32 %v249, %v350
    %v352 = vpop.f32.mrb[0].mxu0
    %v353 = vadd.f32 %v253, %v352
    %354 = vmatprep.mubr.f32.mxu0 %v93
    %355 = vmatmul.mubr.f32.gmra.mrb[0].mxu0 %v92
    %v356 = vpop.f32.mrb[0].mxu0
    %v357 = vadd.f32 %v249, %v356
    %v358 = vpop.f32.mrb[0].mxu0
    %v359 = vadd.f32 %v253, %v358
    %360 = vmatprep.mubr.f32.mxu0 %v95
    %361 = vmatmul.mubr.f32.gmra.mrb[0].mxu0 %v94
    %v362 = vpop.f32.mrb[0].mxu0
    %v363 = vadd.f32 %v249, %v362
    %v364 = vpop.f32.mrb[0].mxu0
    %v365 = vadd.f32 %v253, %v364
    %366 = vmatprep.mubr.f32.mxu0 %v97
    %367 = vmatmul.mubr.f32.gmra.mrb[0].mxu0 %v96
    %v368 = vpop.f32.mrb[0].mxu0
    %v369 = vadd.f32 %v249, %v368
    %v370 = vpop.f32.mrb[0].mxu0
    %v371 = vadd.f32 %v253, %v370
    %372 = vmatprep.mubr.f32.mxu0 %v99
    %373 = vmatmul.mubr.f32.gmra.mrb[0].mxu0 %v98
    %v374 = vpop.f32.mrb[0].mxu0
    %v375 = vadd.f32 %v249, %v374
    %v376 = vpop.f32.mrb[0].mxu0
    %v377 = vadd.f32 %v253, %v376
    %378 = vmatprep.mubr.f32.mxu0 %v101
    %379 = vmatmul.mubr.f32.gmra.mrb[0].mxu0 %v100
    %v380 = vpop.f32.mrb[0].mxu0
    %v381 = vadd.f32 %v249, %v380
    %v382 = vpop.f32.mrb[0].mxu0
    %v383 = vadd.f32 %v253, %v382
    %384 = vmatprep.mubr.f32.mxu0 %v103
    %385 = vmatmul.mubr.f32.gmra.mrb[0].mxu0 %v102
    %v386 = vpop.f32.mrb[0].mxu0
    %v387 = vadd.f32 %v249, %v386
    %v388 = vpop.f32.mrb[0].mxu0
    %v389 = vadd.f32 %v253, %v388
    %390 = vmatprep.mubr.f32.mxu0 %v105
    %391 = vmatmul.mubr.f32.gmra.mrb[0].mxu0 %v104
    %v392 = vpop.f32.mrb[0].mxu0
    %v393 = vadd.f32 %v249, %v392
    %v394 = vpop.f32.mrb[0].mxu0
    %v395 = vadd.f32 %v253, %v394
    %396 = vmatprep.mubr.f32.mxu0 %v107
    %397 = vmatmul.mubr.f32.gmra.mrb[0].mxu0 %v106
    %v398 = vpop.f32.mrb[0].mxu0
    %v399 = vadd.f32 %v249, %v398
    %v400 = vpop.f32.mrb[0].mxu0
    %v401 = vadd.f32 %v253, %v400
    %402 = vmatprep.mubr.f32.mxu0 %v109
    %403 = vmatmul.mubr.f32.gmra.mrb[0].mxu0 %v108
    %v404 = vpop.f32.mrb[0].mxu0
    %v405 = vadd.f32 %v249, %v404
    %v406 = vpop.f32.mrb[0].mxu0
    %v407 = vadd.f32 %v253, %v406
    %408 = vmatprep.mubr.f32.mxu0 %v111
    %409 = vmatmul.mubr.f32.gmra.mrb[0].mxu0 %v110
    %v410 = vpop.f32.mrb[0].mxu0
    %v411 = vadd.f32 %v249, %v410
    %v412 = vpop.f32.mrb[0].mxu0
    %v413 = vadd.f32 %v253, %v412
    %414 = vmatprep.mubr.f32.mxu0 %v113
    %415 = vmatmul.mubr.f32.gmra.mrb[0].mxu0 %v112
    %v416 = vpop.f32.mrb[0].mxu0
    %v417 = vadd.f32 %v249, %v416
    %v418 = vpop.f32.mrb[0].mxu0
    %v419 = vadd.f32 %v253, %v418
    %420 = vmatprep.mubr.f32.mxu0 %v115
    %421 = vmatmul.mubr.f32.gmra.mrb[0].mxu0 %v114
    %v422 = vpop.f32.mrb[0].mxu0
    %v423 = vadd.f32 %v249, %v422
    %v424 = vpop.f32.mrb[0].mxu0
    %v425 = vadd.f32 %v253, %v424
    %426 = vdwg.mxu0
    %427 = vmatprep.subr.mxu0 %v119
    %428 = vmatpush1.msra.mxu0 %v118
    %429 = vmatprep.subr.mxu0 %v123
    %430 = vmatpush1.msra.mxu0 %v122
    %431 = vmatprep.subr.mxu0 %v127
    %432 = vmatpush1.msra.mxu0 %v126
    %433 = vmatprep.subr.mxu0 %v131
    %434 = vmatpush1.msra.mxu0 %v130
    %435 = vmatprep.subr.mxu0 %v135
    %436 = vmatpush1.msra.mxu0 %v134
    %437 = vmatprep.subr.mxu0 %v139
    %438 = vmatpush1.msra.mxu0 %v138
    %439 = vmatprep.subr.mxu0 %v143
    %440 = vmatpush1.msra.mxu0 %v142
    %441 = vmatprep.subr.mxu0 %v147
    %442 = vmatpush1.msra.mxu0 %v146
    %443 = vmatprep.subr.mxu0 %v151
    %444 = vmatpush1.msra.mxu0 %v150
    %445 = vmatprep.subr.mxu0 %v155
    %446 = vmatpush1.msra.mxu0 %v154
    %447 = vmatprep.subr.mxu0 %v159
    %448 = vmatpush1.msra.mxu0 %v158
    %449 = vmatprep.subr.mxu0 %v163
    %450 = vmatpush1.msra.mxu0 %v162
    %451 = vmatprep.subr.mxu0 %v167
    %452 = vmatpush1.msra.mxu0 %v166
    %453 = vmatprep.subr.mxu0 %v171
    %454 = vmatpush1.msra.mxu0 %v170
    %455 = vmatprep.subr.mxu0 %v175
    %456 = vmatpush1.msra.mxu0 %v174
    %457 = vmatprep.subr.mxu0 %v179
    %458 = vmatpush1.msra.mxu0 %v178
    %459 = vmatprep.subr.mxu0 %v183
    %460 = vmatpush1.msra.mxu0 %v182
    %461 = vmatprep.subr.mxu0 %v187
    %462 = vmatpush1.msra.mxu0 %v186
    %463 = vmatprep.subr.mxu0 %v191
    %464 = vmatpush1.msra.mxu0 %v190
    %465 = vmatprep.subr.mxu0 %v195
    %466 = vmatpush1.msra.mxu0 %v194
    %467 = vmatprep.subr.mxu0 %v199
    %468 = vmatpush1.msra.mxu0 %v198
    %469 = vmatprep.subr.mxu0 %v203
    %470 = vmatpush1.msra.mxu0 %v202
    %471 = vmatprep.subr.mxu0 %v207
    %472 = vmatpush1.msra.mxu0 %v206
    %473 = vmatprep.subr.mxu0 %v211
    %474 = vmatpush1.msra.mxu0 %v210
    %475 = vmatprep.subr.mxu0 %v215
    %476 = vmatpush1.msra.mxu0 %v214
    %477 = vmatprep.subr.mxu0 %v219
    %478 = vmatpush1.msra.mxu0 %v218
    %479 = vmatprep.subr.mxu0 %v223
    %480 = vmatpush1.msra.mxu0 %v222
    %481 = vmatprep.subr.mxu0 %v227
    %482 = vmatpush1.msra.mxu0 %v226
    %483 = vmatprep.subr.mxu0 %v231
    %484 = vmatpush1.msra.mxu0 %v230
    %485 = vmatprep.subr.mxu0 %v235
    %486 = vmatpush1.msra.mxu0 %v234
    %487 = vmatprep.subr.mxu0 %v239
    %488 = vmatpush1.msra.mxu0 %v238
    %489 = vmatprep.subr.mxu0 %v243
    %490 = vmatpush1.msra.mxu0 %v242
    %491 = vmatprep.mubr.f32.mxu0 %v85
    %492 = vmatmul.mubr.f32.gmra.mrb[0].mxu0 %v84
    %v493 = vpop.f32.mrb[0].mxu0
    %v494 = vadd.f32 %v257, %v493
    %v495 = vpop.f32.mrb[0].mxu0
    %v496 = vadd.f32 %v261, %v495
    %497 = vmatprep.mubr.f32.mxu0 %v87
    %498 = vmatmul.mubr.f32.gmra.mrb[0].mxu0 %v86
    %v499 = vpop.f32.mrb[0].mxu0
    %v500 = vadd.f32 %v257, %v499
    %v501 = vpop.f32.mrb[0].mxu0
    %v502 = vadd.f32 %v261, %v501
    %503 = vmatprep.mubr.f32.mxu0 %v89
    %504 = vmatmul.mubr.f32.gmra.mrb[0].mxu0 %v88
    %v505 = vpop.f32.mrb[0].mxu0
    %v506 = vadd.f32 %v257, %v505
    %v507 = vpop.f32.mrb[0].mxu0
    %v508 = vadd.f32 %v261, %v507
    %509 = vmatprep.mubr.f32.mxu0 %v91
    %510 = vmatmul.mubr.f32.gmra.mrb[0].mxu0 %v90
    %v511 = vpop.f32.mrb[0].mxu0
    %v512 = vadd.f32 %v257, %v511
    %v513 = vpop.f32.mrb[0].mxu0
    %v514 = vadd.f32 %v261, %v513
    %515 = vmatprep.mubr.f32.mxu0 %v93
    %516 = vmatmul.mubr.f32.gmra.mrb[0].mxu0 %v92
    %v517 = vpop.f32.mrb[0].mxu0
    %v518 = vadd.f32 %v257, %v517
    %v519 = vpop.f32.mrb[0].mxu0
    %v520 = vadd.f32 %v261, %v519
    %521 = vmatprep.mubr.f32.mxu0 %v95
    %522 = vmatmul.mubr.f32.gmra.mrb[0].mxu0 %v94
    %v523 = vpop.f32.mrb[0].mxu0
    %v524 = vadd.f32 %v257, %v523
    %v525 = vpop.f32.mrb[0].mxu0
    %v526 = vadd.f32 %v261, %v525
    %527 = vmatprep.mubr.f32.mxu0 %v97
    %528 = vmatmul.mubr.f32.gmra.mrb[0].mxu0 %v96
    %v529 = vpop.f32.mrb[0].mxu0
    %v530 = vadd.f32 %v257, %v529
    %v531 = vpop.f32.mrb[0].mxu0
    %v532 = vadd.f32 %v261, %v531
    %533 = vmatprep.mubr.f32.mxu0 %v99
    %534 = vmatmul.mubr.f32.gmra.mrb[0].mxu0 %v98
    %v535 = vpop.f32.mrb[0].mxu0
    %v536 = vadd.f32 %v257, %v535
    %v537 = vpop.f32.mrb[0].mxu0
    %v538 = vadd.f32 %v261, %v537
    %539 = vmatprep.mubr.f32.mxu0 %v101
    %540 = vmatmul.mubr.f32.gmra.mrb[0].mxu0 %v100
    %v541 = vpop.f32.mrb[0].mxu0
    %v542 = vadd.f32 %v257, %v541
    %v543 = vpop.f32.mrb[0].mxu0
    %v544 = vadd.f32 %v261, %v543
    %545 = vmatprep.mubr.f32.mxu0 %v103
    %546 = vmatmul.mubr.f32.gmra.mrb[0].mxu0 %v102
    %v547 = vpop.f32.mrb[0].mxu0
    %v548 = vadd.f32 %v257, %v547
    %v549 = vpop.f32.mrb[0].mxu0
    %v550 = vadd.f32 %v261, %v549
    %551 = vmatprep.mubr.f32.mxu0 %v105
    %552 = vmatmul.mubr.f32.gmra.mrb[0].mxu0 %v104
    %v553 = vpop.f32.mrb[0].mxu0
    %v554 = vadd.f32 %v257, %v553
    %v555 = vpop.f32.mrb[0].mxu0
    %v556 = vadd.f32 %v261, %v555
    %557 = vmatprep.mubr.f32.mxu0 %v107
    %558 = vmatmul.mubr.f32.gmra.mrb[0].mxu0 %v106
    %v559 = vpop.f32.mrb[0].mxu0
    %v560 = vadd.f32 %v257, %v559
    %v561 = vpop.f32.mrb[0].mxu0
    %v562 = vadd.f32 %v261, %v561
    %563 = vmatprep.mubr.f32.mxu0 %v109
    %564 = vmatmul.mubr.f32.gmra.mrb[0].mxu0 %v108
    %v565 = vpop.f32.mrb[0].mxu0
    %v566 = vadd.f32 %v257, %v565
    %v567 = vpop.f32.mrb[0].mxu0
    %v568 = vadd.f32 %v261, %v567
    %569 = vmatprep.mubr.f32.mxu0 %v111
    %570 = vmatmul.mubr.f32.gmra.mrb[0].mxu0 %v110
    %v571 = vpop.f32.mrb[0].mxu0
    %v572 = vadd.f32 %v257, %v571
    %v573 = vpop.f32.mrb[0].mxu0
    %v574 = vadd.f32 %v261, %v573
    %575 = vmatprep.mubr.f32.mxu0 %v113
    %576 = vmatmul.mubr.f32.gmra.mrb[0].mxu0 %v112
    %v577 = vpop.f32.mrb[0].mxu0
    %v578 = vadd.f32 %v257, %v577
    %v579 = vpop.f32.mrb[0].mxu0
    %v580 = vadd.f32 %v261, %v579
    %581 = vmatprep.mubr.f32.mxu0 %v115
    %582 = vmatmul.mubr.f32.gmra.mrb[0].mxu0 %v114
    %v583 = vpop.f32.mrb[0].mxu0
    %v584 = vadd.f32 %v257, %v583
    %v585 = vpop.f32.mrb[0].mxu0
    %v586 = vadd.f32 %v261, %v585
    %587 = vdwg.mxu0
    %v588 = vmax.f32 %v333, 0.0
    %v589 = vmax.f32 %v335, 0.0
    %v590 = vmax.f32 %v494, 0.0
    %v591 = vmax.f32 %v496, 0.0
    %v592 = vmax.f32 %v339, 0.0
    %v593 = vmax.f32 %v341, 0.0
    %v594 = vmax.f32 %v500, 0.0
    %v595 = vmax.f32 %v502, 0.0
    %v596 = vmax.f32 %v345, 0.0
    %v597 = vmax.f32 %v347, 0.0
    %v598 = vmax.f32 %v506, 0.0
    %v599 = vmax.f32 %v508, 0.0
    %v600 = vmax.f32 %v351, 0.0
    %v601 = vmax.f32 %v353, 0.0
    %v602 = vmax.f32 %v512, 0.0
    %v603 = vmax.f32 %v514, 0.0
    %v604 = vmax.f32 %v357, 0.0
    %v605 = vmax.f32 %v359, 0.0
    %v606 = vmax.f32 %v518, 0.0
    %v607 = vmax.f32 %v520, 0.0
    %v608 = vmax.f32 %v363, 0.0
    %v609 = vmax.f32 %v365, 0.0
    %v610 = vmax.f32 %v524, 0.0
    %v611 = vmax.f32 %v526, 0.0
    %v612 = vmax.f32 %v369, 0.0
    %v613 = vmax.f32 %v371, 0.0
    %v614 = vmax.f32 %v530, 0.0
    %v615 = vmax.f32 %v532, 0.0
    %v616 = vmax.f32 %v375, 0.0
    %v617 = vmax.f32 %v377, 0.0
    %v618 = vmax.f32 %v536, 0.0
    %v619 = vmax.f32 %v538, 0.0
    %v620 = vmax.f32 %v381, 0.0
    %v621 = vmax.f32 %v383, 0.0
    %v622 = vmax.f32 %v542, 0.0
    %v623 = vmax.f32 %v544, 0.0
    %v624 = vmax.f32 %v387, 0.0
    %v625 = vmax.f32 %v389, 0.0
    %v626 = vmax.f32 %v548, 0.0
    %v627 = vmax.f32 %v550, 0.0
    %v628 = vmax.f32 %v393, 0.0
    %v629 = vmax.f32 %v395, 0.0
    %v630 = vmax.f32 %v554, 0.0
    %v631 = vmax.f32 %v556, 0.0
    %v632 = vmax.f32 %v399, 0.0
    %v633 = vmax.f32 %v401, 0.0
    %v634 = vmax.f32 %v560, 0.0
    %v635 = vmax.f32 %v562, 0.0
    %v636 = vmax.f32 %v405, 0.0
    %v637 = vmax.f32 %v407, 0.0
    %v638 = vmax.f32 %v566, 0.0
    %v639 = vmax.f32 %v568, 0.0
    %v640 = vmax.f32 %v411, 0.0
    %v641 = vmax.f32 %v413, 0.0
    %v642 = vmax.f32 %v572, 0.0
    %v643 = vmax.f32 %v574, 0.0
    %v644 = vmax.f32 %v417, 0.0
    %v645 = vmax.f32 %v419, 0.0
    %v646 = vmax.f32 %v578, 0.0
    %v647 = vmax.f32 %v580, 0.0
    %v648 = vmax.f32 %v423, 0.0
    %v649 = vmax.f32 %v425, 0.0
    %v650 = vmax.f32 %v584, 0.0
    %v651 = vmax.f32 %v586, 0.0
    %v652 = vld [vmem:[#allocation2] sm:$0xff]
    %v653 = vld [vmem:[#allocation2 + $0x8] sm:$0xff]
    %v654 = vld [vmem:[#allocation2 + $0x10] sm:$0xff]
    %v655 = vld [vmem:[#allocation2 + $0x18] sm:$0xff]
    %v656 = vld [vmem:[#allocation2 + $0x20] sm:$0xff]
    %v657 = vld [vmem:[#allocation2 + $0x28] sm:$0xff]
    %v658 = vld [vmem:[#allocation2 + $0x30] sm:$0xff]
    %v659 = vld [vmem:[#allocation2 + $0x38] sm:$0xff]
    %v660 = vld [vmem:[#allocation2 + $0x40] sm:$0xff]
    %v661 = vld [vmem:[#allocation2 + $0x48] sm:$0xff]
    %v662 = vld [vmem:[#allocation2 + $0x50] sm:$0xff]
    %v663 = vld [vmem:[#allocation2 + $0x58] sm:$0xff]
    %v664 = vld [vmem:[#allocation2 + $0x60] sm:$0xff]
    %v665 = vld [vmem:[#allocation2 + $0x68] sm:$0xff]
    %v666 = vld [vmem:[#allocation2 + $0x70] sm:$0xff]
    %v667 = vld [vmem:[#allocation2 + $0x78] sm:$0xff]
    %v668 = vld [vmem:[#allocation2 + $0x80] sm:$0xff]
    %v669 = vld [vmem:[#allocation2 + $0x88] sm:$0xff]
    %v670 = vld [vmem:[#allocation2 + $0x90] sm:$0xff]
    %v671 = vld [vmem:[#allocation2 + $0x98] sm:$0xff]
    %v672 = vld [vmem:[#allocation2 + $0xa0] sm:$0xff]
    %v673 = vld [vmem:[#allocation2 + $0xa8] sm:$0xff]
    %v674 = vld [vmem:[#allocation2 + $0xb0] sm:$0xff]
    %v675 = vld [vmem:[#allocation2 + $0xb8] sm:$0xff]
    %v676 = vld [vmem:[#allocation2 + $0xc0] sm:$0xff]
    %v677 = vld [vmem:[#allocation2 + $0xc8] sm:$0xff]
    %v678 = vld [vmem:[#allocation2 + $0xd0] sm:$0xff]
    %v679 = vld [vmem:[#allocation2 + $0xd8] sm:$0xff]
    %v680 = vld [vmem:[#allocation2 + $0xe0] sm:$0xff]
    %v681 = vld [vmem:[#allocation2 + $0xe8] sm:$0xff]
    %v682 = vld [vmem:[#allocation2 + $0xf0] sm:$0xff]
    %v683 = vld [vmem:[#allocation2 + $0xf8] sm:$0xff]
    %v684 = vld [vmem:[#allocation5] sm:$0xff]
    %v685 = vld [vmem:[#allocation5 + $0x8] sm:$0xff]
    %v686 = vld [vmem:[#allocation5 + $0x10] sm:$0xff]
    %v687 = vld [vmem:[#allocation5 + $0x18] sm:$0xff]
    %v688 = vld [vmem:[#allocation5 + $0x20] sm:$0xff]
    %v689 = vld [vmem:[#allocation5 + $0x28] sm:$0xff]
    %v690 = vld [vmem:[#allocation5 + $0x30] sm:$0xff]
    %v691 = vld [vmem:[#allocation5 + $0x38] sm:$0xff]
    %v692 = vld [vmem:[#allocation5 + $0x40] sm:$0xff]
    %v693 = vld [vmem:[#allocation5 + $0x48] sm:$0xff]
    %v694 = vld [vmem:[#allocation5 + $0x50] sm:$0xff]
    %v695 = vld [vmem:[#allocation5 + $0x58] sm:$0xff]
    %v696 = vld [vmem:[#allocation5 + $0x60] sm:$0xff]
    %v697 = vld [vmem:[#allocation5 + $0x68] sm:$0xff]
    %v698 = vld [vmem:[#allocation5 + $0x70] sm:$0xff]
    %v699 = vld [vmem:[#allocation5 + $0x78] sm:$0xff]
    %v700 = vld [vmem:[#allocation5 + $0x80] sm:$0xff]
    %v701 = vld [vmem:[#allocation5 + $0x88] sm:$0xff]
    %v702 = vld [vmem:[#allocation5 + $0x90] sm:$0xff]
    %v703 = vld [vmem:[#allocation5 + $0x98] sm:$0xff]
    %v704 = vld [vmem:[#allocation5 + $0xa0] sm:$0xff]
    %v705 = vld [vmem:[#allocation5 + $0xa8] sm:$0xff]
    %v706 = vld [vmem:[#allocation5 + $0xb0] sm:$0xff]
    %v707 = vld [vmem:[#allocation5 + $0xb8] sm:$0xff]
    %v708 = vld [vmem:[#allocation5 + $0xc0] sm:$0xff]
    %v709 = vld [vmem:[#allocation5 + $0xc8] sm:$0xff]
    %v710 = vld [vmem:[#allocation5 + $0xd0] sm:$0xff]
    %v711 = vld [vmem:[#allocation5 + $0xd8] sm:$0xff]
    %v712 = vld [vmem:[#allocation5 + $0xe0] sm:$0xff]
    %v713 = vld [vmem:[#allocation5 + $0xe8] sm:$0xff]
    %v714 = vld [vmem:[#allocation5 + $0xf0] sm:$0xff]
    %v715 = vld [vmem:[#allocation5 + $0xf8] sm:$0xff]
    %v716 = vld [vmem:[#allocation5 + $0x100] sm:$0xff]
    %v717 = vld [vmem:[#allocation5 + $0x108] sm:$0xff]
    %v718 = vld [vmem:[#allocation5 + $0x110] sm:$0xff]
    %v719 = vld [vmem:[#allocation5 + $0x118] sm:$0xff]
    %v720 = vld [vmem:[#allocation5 + $0x120] sm:$0xff]
    %v721 = vld [vmem:[#allocation5 + $0x128] sm:$0xff]
    %v722 = vld [vmem:[#allocation5 + $0x130] sm:$0xff]
    %v723 = vld [vmem:[#allocation5 + $0x138] sm:$0xff]
    %v724 = vld [vmem:[#allocation5 + $0x140] sm:$0xff]
    %v725 = vld [vmem:[#allocation5 + $0x148] sm:$0xff]
    %v726 = vld [vmem:[#allocation5 + $0x150] sm:$0xff]
    %v727 = vld [vmem:[#allocation5 + $0x158] sm:$0xff]
    %v728 = vld [vmem:[#allocation5 + $0x160] sm:$0xff]
    %v729 = vld [vmem:[#allocation5 + $0x168] sm:$0xff]
    %v730 = vld [vmem:[#allocation5 + $0x170] sm:$0xff]
    %v731 = vld [vmem:[#allocation5 + $0x178] sm:$0xff]
    %v732 = vld [vmem:[#allocation5 + $0x180] sm:$0xff]
    %v733 = vld [vmem:[#allocation5 + $0x188] sm:$0xff]
    %v734 = vld [vmem:[#allocation5 + $0x190] sm:$0xff]
    %v735 = vld [vmem:[#allocation5 + $0x198] sm:$0xff]
    %v736 = vld [vmem:[#allocation5 + $0x1a0] sm:$0xff]
    %v737 = vld [vmem:[#allocation5 + $0x1a8] sm:$0xff]
    %v738 = vld [vmem:[#allocation5 + $0x1b0] sm:$0xff]
    %v739 = vld [vmem:[#allocation5 + $0x1b8] sm:$0xff]
    %v740 = vld [vmem:[#allocation5 + $0x1c0] sm:$0xff]
    %v741 = vld [vmem:[#allocation5 + $0x1c8] sm:$0xff]
    %v742 = vld [vmem:[#allocation5 + $0x1d0] sm:$0xff]
    %v743 = vld [vmem:[#allocation5 + $0x1d8] sm:$0xff]
    %v744 = vld [vmem:[#allocation5 + $0x1e0] sm:$0xff]
    %v745 = vld [vmem:[#allocation5 + $0x1e8] sm:$0xff]
    %v746 = vld [vmem:[#allocation5 + $0x1f0] sm:$0xff]
    %v747 = vld [vmem:[#allocation5 + $0x1f8] sm:$0xff]
    %v748 = vld [vmem:[#allocation5 + $0x200] sm:$0xff]
    %v749 = vld [vmem:[#allocation5 + $0x208] sm:$0xff]
    %v750 = vld [vmem:[#allocation5 + $0x210] sm:$0xff]
    %v751 = vld [vmem:[#allocation5 + $0x218] sm:$0xff]
    %v752 = vld [vmem:[#allocation5 + $0x220] sm:$0xff]
    %v753 = vld [vmem:[#allocation5 + $0x228] sm:$0xff]
    %v754 = vld [vmem:[#allocation5 + $0x230] sm:$0xff]
    %v755 = vld [vmem:[#allocation5 + $0x238] sm:$0xff]
    %v756 = vld [vmem:[#allocation5 + $0x240] sm:$0xff]
    %v757 = vld [vmem:[#allocation5 + $0x248] sm:$0xff]
    %v758 = vld [vmem:[#allocation5 + $0x250] sm:$0xff]
    %v759 = vld [vmem:[#allocation5 + $0x258] sm:$0xff]
    %v760 = vld [vmem:[#allocation5 + $0x260] sm:$0xff]
    %v761 = vld [vmem:[#allocation5 + $0x268] sm:$0xff]
    %v762 = vld [vmem:[#allocation5 + $0x270] sm:$0xff]
    %v763 = vld [vmem:[#allocation5 + $0x278] sm:$0xff]
    %v764 = vld [vmem:[#allocation5 + $0x280] sm:$0xff]
    %v765 = vld [vmem:[#allocation5 + $0x288] sm:$0xff]
    %v766 = vld [vmem:[#allocation5 + $0x290] sm:$0xff]
    %v767 = vld [vmem:[#allocation5 + $0x298] sm:$0xff]
    %v768 = vld [vmem:[#allocation5 + $0x2a0] sm:$0xff]
    %v769 = vld [vmem:[#allocation5 + $0x2a8] sm:$0xff]
    %v770 = vld [vmem:[#allocation5 + $0x2b0] sm:$0xff]
    %v771 = vld [vmem:[#allocation5 + $0x2b8] sm:$0xff]
    %v772 = vld [vmem:[#allocation5 + $0x2c0] sm:$0xff]
    %v773 = vld [vmem:[#allocation5 + $0x2c8] sm:$0xff]
    %v774 = vld [vmem:[#allocation5 + $0x2d0] sm:$0xff]
    %v775 = vld [vmem:[#allocation5 + $0x2d8] sm:$0xff]
    %v776 = vld [vmem:[#allocation5 + $0x2e0] sm:$0xff]
    %v777 = vld [vmem:[#allocation5 + $0x2e8] sm:$0xff]
    %v778 = vld [vmem:[#allocation5 + $0x2f0] sm:$0xff]
    %v779 = vld [vmem:[#allocation5 + $0x2f8] sm:$0xff]
    %v780 = vld [vmem:[#allocation5 + $0x300] sm:$0xff]
    %v781 = vld [vmem:[#allocation5 + $0x308] sm:$0xff]
    %v782 = vld [vmem:[#allocation5 + $0x310] sm:$0xff]
    %v783 = vld [vmem:[#allocation5 + $0x318] sm:$0xff]
    %v784 = vld [vmem:[#allocation5 + $0x320] sm:$0xff]
    %v785 = vld [vmem:[#allocation5 + $0x328] sm:$0xff]
    %v786 = vld [vmem:[#allocation5 + $0x330] sm:$0xff]
    %v787 = vld [vmem:[#allocation5 + $0x338] sm:$0xff]
    %v788 = vld [vmem:[#allocation5 + $0x340] sm:$0xff]
    %v789 = vld [vmem:[#allocation5 + $0x348] sm:$0xff]
    %v790 = vld [vmem:[#allocation5 + $0x350] sm:$0xff]
    %v791 = vld [vmem:[#allocation5 + $0x358] sm:$0xff]
    %v792 = vld [vmem:[#allocation5 + $0x360] sm:$0xff]
    %v793 = vld [vmem:[#allocation5 + $0x368] sm:$0xff]
    %v794 = vld [vmem:[#allocation5 + $0x370] sm:$0xff]
    %v795 = vld [vmem:[#allocation5 + $0x378] sm:$0xff]
    %v796 = vld [vmem:[#allocation5 + $0x380] sm:$0xff]
    %v797 = vld [vmem:[#allocation5 + $0x388] sm:$0xff]
    %v798 = vld [vmem:[#allocation5 + $0x390] sm:$0xff]
    %v799 = vld [vmem:[#allocation5 + $0x398] sm:$0xff]
    %v800 = vld [vmem:[#allocation5 + $0x3a0] sm:$0xff]
    %v801 = vld [vmem:[#allocation5 + $0x3a8] sm:$0xff]
    %v802 = vld [vmem:[#allocation5 + $0x3b0] sm:$0xff]
    %v803 = vld [vmem:[#allocation5 + $0x3b8] sm:$0xff]
    %v804 = vld [vmem:[#allocation5 + $0x3c0] sm:$0xff]
    %v805 = vld [vmem:[#allocation5 + $0x3c8] sm:$0xff]
    %v806 = vld [vmem:[#allocation5 + $0x3d0] sm:$0xff]
    %v807 = vld [vmem:[#allocation5 + $0x3d8] sm:$0xff]
    %v808 = vld [vmem:[#allocation5 + $0x3e0] sm:$0xff]
    %v809 = vld [vmem:[#allocation5 + $0x3e8] sm:$0xff]
    %v810 = vld [vmem:[#allocation5 + $0x3f0] sm:$0xff]
    %v811 = vld [vmem:[#allocation5 + $0x3f8] sm:$0xff]
    %812 = vmatprep.subr.mxu0 %v685
    %813 = vmatpush1.msra.mxu0 %v684
    %814 = vmatprep.subr.mxu0 %v687
    %815 = vmatpush1.msra.mxu0 %v686
    %816 = vmatprep.subr.mxu0 %v689
    %817 = vmatpush1.msra.mxu0 %v688
    %818 = vmatprep.subr.mxu0 %v691
    %819 = vmatpush1.msra.mxu0 %v690
    %820 = vmatprep.subr.mxu0 %v693
    %821 = vmatpush1.msra.mxu0 %v692
    %822 = vmatprep.subr.mxu0 %v695
    %823 = vmatpush1.msra.mxu0 %v694
    %824 = vmatprep.subr.mxu0 %v697
    %825 = vmatpush1.msra.mxu0 %v696
    %826 = vmatprep.subr.mxu0 %v699
    %827 = vmatpush1.msra.mxu0 %v698
    %828 = vmatprep.subr.mxu0 %v701
    %829 = vmatpush1.msra.mxu0 %v700
    %830 = vmatprep.subr.mxu0 %v703
    %831 = vmatpush1.msra.mxu0 %v702
    %832 = vmatprep.subr.mxu0 %v705
    %833 = vmatpush1.msra.mxu0 %v704
    %834 = vmatprep.subr.mxu0 %v707
    %835 = vmatpush1.msra.mxu0 %v706
    %836 = vmatprep.subr.mxu0 %v709
    %837 = vmatpush1.msra.mxu0 %v708
    %838 = vmatprep.subr.mxu0 %v711
    %839 = vmatpush1.msra.mxu0 %v710
    %840 = vmatprep.subr.mxu0 %v713
    %841 = vmatpush1.msra.mxu0 %v712
    %842 = vmatprep.subr.mxu0 %v715
    %843 = vmatpush1.msra.mxu0 %v714
    %844 = vmatprep.subr.mxu0 %v717
    %845 = vmatpush1.msra.mxu0 %v716
    %846 = vmatprep.subr.mxu0 %v719
    %847 = vmatpush1.msra.mxu0 %v718
    %848 = vmatprep.subr.mxu0 %v721
    %849 = vmatpush1.msra.mxu0 %v720
    %850 = vmatprep.subr.mxu0 %v723
    %851 = vmatpush1.msra.mxu0 %v722
    %852 = vmatprep.subr.mxu0 %v725
    %853 = vmatpush1.msra.mxu0 %v724
    %854 = vmatprep.subr.mxu0 %v727
    %855 = vmatpush1.msra.mxu0 %v726
    %856 = vmatprep.subr.mxu0 %v729
    %857 = vmatpush1.msra.mxu0 %v728
    %858 = vmatprep.subr.mxu0 %v731
    %859 = vmatpush1.msra.mxu0 %v730
    %860 = vmatprep.subr.mxu0 %v733
    %861 = vmatpush1.msra.mxu0 %v732
    %862 = vmatprep.subr.mxu0 %v735
    %863 = vmatpush1.msra.mxu0 %v734
    %864 = vmatprep.subr.mxu0 %v737
    %865 = vmatpush1.msra.mxu0 %v736
    %866 = vmatprep.subr.mxu0 %v739
    %867 = vmatpush1.msra.mxu0 %v738
    %868 = vmatprep.subr.mxu0 %v741
    %869 = vmatpush1.msra.mxu0 %v740
    %870 = vmatprep.subr.mxu0 %v743
    %871 = vmatpush1.msra.mxu0 %v742
    %872 = vmatprep.subr.mxu0 %v745
    %873 = vmatpush1.msra.mxu0 %v744
    %874 = vmatprep.subr.mxu0 %v747
    %875 = vmatpush1.msra.mxu0 %v746
    %876 = vmatprep.mubr.f32.mxu0 %v589
    %877 = vmatmul.mubr.f32.gmra.mrb[0].mxu0 %v588
    %v878 = vpop.f32.mrb[0].mxu0
    %v879 = vadd.f32 0.0, %v878
    %v880 = vpop.f32.mrb[0].mxu0
    %v881 = vadd.f32 0.0, %v880
    %882 = vmatprep.mubr.f32.mxu0 %v593
    %883 = vmatmul.mubr.f32.gmra.mrb[0].mxu0 %v592
    %v884 = vpop.f32.mrb[0].mxu0
    %v885 = vadd.f32 0.0, %v884
    %v886 = vpop.f32.mrb[0].mxu0
    %v887 = vadd.f32 0.0, %v886
    %888 = vmatprep.mubr.f32.mxu0 %v597
    %889 = vmatmul.mubr.f32.gmra.mrb[0].mxu0 %v596
    %v890 = vpop.f32.mrb[0].mxu0
    %v891 = vadd.f32 0.0, %v890
    %v892 = vpop.f32.mrb[0].mxu0
    %v893 = vadd.f32 0.0, %v892
    %894 = vmatprep.mubr.f32.mxu0 %v601
    %895 = vmatmul.mubr.f32.gmra.mrb[0].mxu0 %v600
    %v896 = vpop.f32.mrb[0].mxu0
    %v897 = vadd.f32 0.0, %v896
    %v898 = vpop.f32.mrb[0].mxu0
    %v899 = vadd.f32 0.0, %v898
    %900 = vmatprep.mubr.f32.mxu0 %v605
    %901 = vmatmul.mubr.f32.gmra.mrb[0].mxu0 %v604
    %v902 = vpop.f32.mrb[0].mxu0
    %v903 = vadd.f32 0.0, %v902
    %v904 = vpop.f32.mrb[0].mxu0
    %v905 = vadd.f32 0.0, %v904
    %906 = vmatprep.mubr.f32.mxu0 %v609
    %907 = vmatmul.mubr.f32.gmra.mrb[0].mxu0 %v608
    %v908 = vpop.f32.mrb[0].mxu0
    %v909 = vadd.f32 0.0, %v908
    %v910 = vpop.f32.mrb[0].mxu0
    %v911 = vadd.f32 0.0, %v910
    %912 = vmatprep.mubr.f32.mxu0 %v613
    %913 = vmatmul.mubr.f32.gmra.mrb[0].mxu0 %v612
    %v914 = vpop.f32.mrb[0].mxu0
    %v915 = vadd.f32 0.0, %v914
    %v916 = vpop.f32.mrb[0].mxu0
    %v917 = vadd.f32 0.0, %v916
    %918 = vmatprep.mubr.f32.mxu0 %v617
    %919 = vmatmul.mubr.f32.gmra.mrb[0].mxu0 %v616
    %v920 = vpop.f32.mrb[0].mxu0
    %v921 = vadd.f32 0.0, %v920
    %v922 = vpop.f32.mrb[0].mxu0
    %v923 = vadd.f32 0.0, %v922
    %924 = vmatprep.mubr.f32.mxu0 %v621
    %925 = vmatmul.mubr.f32.gmra.mrb[0].mxu0 %v620
    %v926 = vpop.f32.mrb[0].mxu0
    %v927 = vadd.f32 0.0, %v926
    %v928 = vpop.f32.mrb[0].mxu0
    %v929 = vadd.f32 0.0, %v928
    %930 = vmatprep.mubr.f32.mxu0 %v625
    %931 = vmatmul.mubr.f32.gmra.mrb[0].mxu0 %v624
    %v932 = vpop.f32.mrb[0].mxu0
    %v933 = vadd.f32 0.0, %v932
    %v934 = vpop.f32.mrb[0].mxu0
    %v935 = vadd.f32 0.0, %v934
    %936 = vmatprep.mubr.f32.mxu0 %v629
    %937 = vmatmul.mubr.f32.gmra.mrb[0].mxu0 %v628
    %v938 = vpop.f32.mrb[0].mxu0
    %v939 = vadd.f32 0.0, %v938
    %v940 = vpop.f32.mrb[0].mxu0
    %v941 = vadd.f32 0.0, %v940
    %942 = vmatprep.mubr.f32.mxu0 %v633
    %943 = vmatmul.mubr.f32.gmra.mrb[0].mxu0 %v632
    %v944 = vpop.f32.mrb[0].mxu0
    %v945 = vadd.f32 0.0, %v944
    %v946 = vpop.f32.mrb[0].mxu0
    %v947 = vadd.f32 0.0, %v946
    %948 = vmatprep.mubr.f32.mxu0 %v637
    %949 = vmatmul.mubr.f32.gmra.mrb[0].mxu0 %v636
    %v950 = vpop.f32.mrb[0].mxu0
    %v951 = vadd.f32 0.0, %v950
    %v952 = vpop.f32.mrb[0].mxu0
    %v953 = vadd.f32 0.0, %v952
    %954 = vmatprep.mubr.f32.mxu0 %v641
    %955 = vmatmul.mubr.f32.gmra.mrb[0].mxu0 %v640
    %v956 = vpop.f32.mrb[0].mxu0
    %v957 = vadd.f32 0.0, %v956
    %v958 = vpop.f32.mrb[0].mxu0
    %v959 = vadd.f32 0.0, %v958
    %960 = vmatprep.mubr.f32.mxu0 %v645
    %961 = vmatmul.mubr.f32.gmra.mrb[0].mxu0 %v644
    %v962 = vpop.f32.mrb[0].mxu0
    %v963 = vadd.f32 0.0, %v962
    %v964 = vpop.f32.mrb[0].mxu0
    %v965 = vadd.f32 0.0, %v964
    %966 = vmatprep.mubr.f32.mxu0 %v649
    %967 = vmatmul.mubr.f32.gmra.mrb[0].mxu0 %v648
    %v968 = vpop.f32.mrb[0].mxu0
    %v969 = vadd.f32 0.0, %v968
    %v970 = vpop.f32.mrb[0].mxu0
    %v971 = vadd.f32 0.0, %v970
    %972 = vdwg.mxu0
    %973 = vmatprep.subr.mxu0 %v749
    %974 = vmatpush1.msra.mxu0 %v748
    %975 = vmatprep.subr.mxu0 %v751
    %976 = vmatpush1.msra.mxu0 %v750
    %977 = vmatprep.subr.mxu0 %v753
    %978 = vmatpush1.msra.mxu0 %v752
    %979 = vmatprep.subr.mxu0 %v755
    %980 = vmatpush1.msra.mxu0 %v754
    %981 = vmatprep.subr.mxu0 %v757
    %982 = vmatpush1.msra.mxu0 %v756
    %983 = vmatprep.subr.mxu0 %v759
    %984 = vmatpush1.msra.mxu0 %v758
    %985 = vmatprep.subr.mxu0 %v761
    %986 = vmatpush1.msra.mxu0 %v760
    %987 = vmatprep.subr.mxu0 %v763
    %988 = vmatpush1.msra.mxu0 %v762
    %989 = vmatprep.subr.mxu0 %v765
    %990 = vmatpush1.msra.mxu0 %v764
    %991 = vmatprep.subr.mxu0 %v767
    %992 = vmatpush1.msra.mxu0 %v766
    %993 = vmatprep.subr.mxu0 %v769
    %994 = vmatpush1.msra.mxu0 %v768
    %995 = vmatprep.subr.mxu0 %v771
    %996 = vmatpush1.msra.mxu0 %v770
    %997 = vmatprep.subr.mxu0 %v773
    %998 = vmatpush1.msra.mxu0 %v772
    %999 = vmatprep.subr.mxu0 %v775
    %1000 = vmatpush1.msra.mxu0 %v774
    %1001 = vmatprep.subr.mxu0 %v777
    %1002 = vmatpush1.msra.mxu0 %v776
    %1003 = vmatprep.subr.mxu0 %v779
    %1004 = vmatpush1.msra.mxu0 %v778
    %1005 = vmatprep.subr.mxu0 %v781
    %1006 = vmatpush1.msra.mxu0 %v780
    %1007 = vmatprep.subr.mxu0 %v783
    %1008 = vmatpush1.msra.mxu0 %v782
    %1009 = vmatprep.subr.mxu0 %v785
    %1010 = vmatpush1.msra.mxu0 %v784
    %1011 = vmatprep.subr.mxu0 %v787
    %1012 = vmatpush1.msra.mxu0 %v786
    %1013 = vmatprep.subr.mxu0 %v789
    %1014 = vmatpush1.msra.mxu0 %v788
    %1015 = vmatprep.subr.mxu0 %v791
    %1016 = vmatpush1.msra.mxu0 %v790
    %1017 = vmatprep.subr.mxu0 %v793
    %1018 = vmatpush1.msra.mxu0 %v792
    %1019 = vmatprep.subr.mxu0 %v795
    %1020 = vmatpush1.msra.mxu0 %v794
    %1021 = vmatprep.subr.mxu0 %v797
    %1022 = vmatpush1.msra.mxu0 %v796
    %1023 = vmatprep.subr.mxu0 %v799
    %1024 = vmatpush1.msra.mxu0 %v798
    %1025 = vmatprep.subr.mxu0 %v801
    %1026 = vmatpush1.msra.mxu0 %v800
    %1027 = vmatprep.subr.mxu0 %v803
    %1028 = vmatpush1.msra.mxu0 %v802
    %1029 = vmatprep.subr.mxu0 %v805
    %1030 = vmatpush1.msra.mxu0 %v804
    %1031 = vmatprep.subr.mxu0 %v807
    %1032 = vmatpush1.msra.mxu0 %v806
    %1033 = vmatprep.subr.mxu0 %v809
    %1034 = vmatpush1.msra.mxu0 %v808
    %1035 = vmatprep.subr.mxu0 %v811
    %1036 = vmatpush1.msra.mxu0 %v810
    %1037 = vmatprep.mubr.f32.mxu0 %v591
    %1038 = vmatmul.mubr.f32.gmra.mrb[0].mxu0 %v590
    %v1039 = vpop.f32.mrb[0].mxu0
    %v1040 = vadd.f32 %v879, %v1039
    %v1041 = vpop.f32.mrb[0].mxu0
    %v1042 = vadd.f32 %v881, %v1041
    %1043 = vmatprep.mubr.f32.mxu0 %v595
    %1044 = vmatmul.mubr.f32.gmra.mrb[0].mxu0 %v594
    %v1045 = vpop.f32.mrb[0].mxu0
    %v1046 = vadd.f32 %v885, %v1045
    %v1047 = vpop.f32.mrb[0].mxu0
    %v1048 = vadd.f32 %v887, %v1047
    %1049 = vmatprep.mubr.f32.mxu0 %v599
    %1050 = vmatmul.mubr.f32.gmra.mrb[0].mxu0 %v598
    %v1051 = vpop.f32.mrb[0].mxu0
    %v1052 = vadd.f32 %v891, %v1051
    %v1053 = vpop.f32.mrb[0].mxu0
    %v1054 = vadd.f32 %v893, %v1053
    %1055 = vmatprep.mubr.f32.mxu0 %v603
    %1056 = vmatmul.mubr.f32.gmra.mrb[0].mxu0 %v602
    %v1057 = vpop.f32.mrb[0].mxu0
    %v1058 = vadd.f32 %v897, %v1057
    %v1059 = vpop.f32.mrb[0].mxu0
    %v1060 = vadd.f32 %v899, %v1059
    %1061 = vmatprep.mubr.f32.mxu0 %v607
    %1062 = vmatmul.mubr.f32.gmra.mrb[0].mxu0 %v606
    %v1063 = vpop.f32.mrb[0].mxu0
    %v1064 = vadd.f32 %v903, %v1063
    %v1065 = vpop.f32.mrb[0].mxu0
    %v1066 = vadd.f32 %v905, %v1065
    %1067 = vmatprep.mubr.f32.mxu0 %v611
    %1068 = vmatmul.mubr.f32.gmra.mrb[0].mxu0 %v610
    %v1069 = vpop.f32.mrb[0].mxu0
    %v1070 = vadd.f32 %v909, %v1069
    %v1071 = vpop.f32.mrb[0].mxu0
    %v1072 = vadd.f32 %v911, %v1071
    %1073 = vmatprep.mubr.f32.mxu0 %v615
    %1074 = vmatmul.mubr.f32.gmra.mrb[0].mxu0 %v614
    %v1075 = vpop.f32.mrb[0].mxu0
    %v1076 = vadd.f32 %v915, %v1075
    %v1077 = vpop.f32.mrb[0].mxu0
    %v1078 = vadd.f32 %v917, %v1077
    %1079 = vmatprep.mubr.f32.mxu0 %v619
    %1080 = vmatmul.mubr.f32.gmra.mrb[0].mxu0 %v618
    %v1081 = vpop.f32.mrb[0].mxu0
    %v1082 = vadd.f32 %v921, %v1081
    %v1083 = vpop.f32.mrb[0].mxu0
    %v1084 = vadd.f32 %v923, %v1083
    %1085 = vmatprep.mubr.f32.mxu0 %v623
    %1086 = vmatmul.mubr.f32.gmra.mrb[0].mxu0 %v622
    %v1087 = vpop.f32.mrb[0].mxu0
    %v1088 = vadd.f32 %v927, %v1087
    %v1089 = vpop.f32.mrb[0].mxu0
    %v1090 = vadd.f32 %v929, %v1089
    %1091 = vmatprep.mubr.f32.mxu0 %v627
    %1092 = vmatmul.mubr.f32.gmra.mrb[0].mxu0 %v626
    %v1093 = vpop.f32.mrb[0].mxu0
    %v1094 = vadd.f32 %v933, %v1093
    %v1095 = vpop.f32.mrb[0].mxu0
    %v1096 = vadd.f32 %v935, %v1095
    %1097 = vmatprep.mubr.f32.mxu0 %v631
    %1098 = vmatmul.mubr.f32.gmra.mrb[0].mxu0 %v630
    %v1099 = vpop.f32.mrb[0].mxu0
    %v1100 = vadd.f32 %v939, %v1099
    %v1101 = vpop.f32.mrb[0].mxu0
    %v1102 = vadd.f32 %v941, %v1101
    %1103 = vmatprep.mubr.f32.mxu0 %v635
    %1104 = vmatmul.mubr.f32.gmra.mrb[0].mxu0 %v634
    %v1105 = vpop.f32.mrb[0].mxu0
    %v1106 = vadd.f32 %v945, %v1105
    %v1107 = vpop.f32.mrb[0].mxu0
    %v1108 = vadd.f32 %v947, %v1107
    %1109 = vmatprep.mubr.f32.mxu0 %v639
    %1110 = vmatmul.mubr.f32.gmra.mrb[0].mxu0 %v638
    %v1111 = vpop.f32.mrb[0].mxu0
    %v1112 = vadd.f32 %v951, %v1111
    %v1113 = vpop.f32.mrb[0].mxu0
    %v1114 = vadd.f32 %v953, %v1113
    %1115 = vmatprep.mubr.f32.mxu0 %v643
    %1116 = vmatmul.mubr.f32.gmra.mrb[0].mxu0 %v642
    %v1117 = vpop.f32.mrb[0].mxu0
    %v1118 = vadd.f32 %v957, %v1117
    %v1119 = vpop.f32.mrb[0].mxu0
    %v1120 = vadd.f32 %v959, %v1119
    %1121 = vmatprep.mubr.f32.mxu0 %v647
    %1122 = vmatmul.mubr.f32.gmra.mrb[0].mxu0 %v646
    %v1123 = vpop.f32.mrb[0].mxu0
    %v1124 = vadd.f32 %v963, %v1123
    %v1125 = vpop.f32.mrb[0].mxu0
    %v1126 = vadd.f32 %v965, %v1125
    %1127 = vmatprep.mubr.f32.mxu0 %v651
    %1128 = vmatmul.mubr.f32.gmra.mrb[0].mxu0 %v650
    %v1129 = vpop.f32.mrb[0].mxu0
    %v1130 = vadd.f32 %v969, %v1129
    %v1131 = vpop.f32.mrb[0].mxu0
    %v1132 = vadd.f32 %v971, %v1131
    %1133 = vdwg.mxu0
    %v1134 = vadd.f32 %v652, %v1040
    %v1135 = vadd.f32 %v653, %v1042
    %v1136 = vadd.f32 %v654, %v1046
    %v1137 = vadd.f32 %v655, %v1048
    %v1138 = vadd.f32 %v656, %v1052
    %v1139 = vadd.f32 %v657, %v1054
    %v1140 = vadd.f32 %v658, %v1058
    %v1141 = vadd.f32 %v659, %v1060
    %v1142 = vadd.f32 %v660, %v1064
    %v1143 = vadd.f32 %v661, %v1066
    %v1144 = vadd.f32 %v662, %v1070
    %v1145 = vadd.f32 %v663, %v1072
    %v1146 = vadd.f32 %v664, %v1076
    %v1147 = vadd.f32 %v665, %v1078
    %v1148 = vadd.f32 %v666, %v1082
    %v1149 = vadd.f32 %v667, %v1084
    %v1150 = vadd.f32 %v668, %v1088
    %v1151 = vadd.f32 %v669, %v1090
    %v1152 = vadd.f32 %v670, %v1094
    %v1153 = vadd.f32 %v671, %v1096
    %v1154 = vadd.f32 %v672, %v1100
    %v1155 = vadd.f32 %v673, %v1102
    %v1156 = vadd.f32 %v674, %v1106
    %v1157 = vadd.f32 %v675, %v1108
    %v1158 = vadd.f32 %v676, %v1112
    %v1159 = vadd.f32 %v677, %v1114
    %v1160 = vadd.f32 %v678, %v1118
    %v1161 = vadd.f32 %v679, %v1120
    %v1162 = vadd.f32 %v680, %v1124
    %v1163 = vadd.f32 %v681, %v1126
    %v1164 = vadd.f32 %v682, %v1130
    %v1165 = vadd.f32 %v683, %v1132
    %1166 = vst [vmem:[#allocation2] sm:$0xff] %v1134
    %1167 = vst [vmem:[#allocation2 + $0x8] sm:$0xff] %v1135
    %1168 = vst [vmem:[#allocation2 + $0x10] sm:$0xff] %v1136
    %1169 = vst [vmem:[#allocation2 + $0x18] sm:$0xff] %v1137
    %1170 = vst [vmem:[#allocation2 + $0x20] sm:$0xff] %v1138
    %1171 = vst [vmem:[#allocation2 + $0x28] sm:$0xff] %v1139
    %1172 = vst [vmem:[#allocation2 + $0x30] sm:$0xff] %v1140
    %1173 = vst [vmem:[#allocation2 + $0x38] sm:$0xff] %v1141
    %1174 = vst [vmem:[#allocation2 + $0x40] sm:$0xff] %v1142
    %1175 = vst [vmem:[#allocation2 + $0x48] sm:$0xff] %v1143
    %1176 = vst [vmem:[#allocation2 + $0x50] sm:$0xff] %v1144
    %1177 = vst [vmem:[#allocation2 + $0x58] sm:$0xff] %v1145
    %1178 = vst [vmem:[#allocation2 + $0x60] sm:$0xff] %v1146
    %1179 = vst [vmem:[#allocation2 + $0x68] sm:$0xff] %v1147
    %1180 = vst [vmem:[#allocation2 + $0x70] sm:$0xff] %v1148
    %1181 = vst [vmem:[#allocation2 + $0x78] sm:$0xff] %v1149
    %1182 = vst [vmem:[#allocation2 + $0x80] sm:$0xff] %v1150
    %1183 = vst [vmem:[#allocation2 + $0x88] sm:$0xff] %v1151
    %1184 = vst [vmem:[#allocation2 + $0x90] sm:$0xff] %v1152
    %1185 = vst [vmem:[#allocation2 + $0x98] sm:$0xff] %v1153
    %1186 = vst [vmem:[#allocation2 + $0xa0] sm:$0xff] %v1154
    %1187 = vst [vmem:[#allocation2 + $0xa8] sm:$0xff] %v1155
    %1188 = vst [vmem:[#allocation2 + $0xb0] sm:$0xff] %v1156
    %1189 = vst [vmem:[#allocation2 + $0xb8] sm:$0xff] %v1157
    %1190 = vst [vmem:[#allocation2 + $0xc0] sm:$0xff] %v1158
    %1191 = vst [vmem:[#allocation2 + $0xc8] sm:$0xff] %v1159
    %1192 = vst [vmem:[#allocation2 + $0xd0] sm:$0xff] %v1160
    %1193 = vst [vmem:[#allocation2 + $0xd8] sm:$0xff] %v1161
    %1194 = vst [vmem:[#allocation2 + $0xe0] sm:$0xff] %v1162
    %1195 = vst [vmem:[#allocation2 + $0xe8] sm:$0xff] %v1163
    %1196 = vst [vmem:[#allocation2 + $0xf0] sm:$0xff] %v1164
    %1197 = vst [vmem:[#allocation2 + $0xf8] sm:$0xff] %v1165
    // Predicated region
    $region34: #{feed_forward.1} parent=1 // pred_check
      %p1198 = pneg %p48
    $region35: #{feed_forward.1} parent=1 // pred_check_branch
      %1200 = sbr.rel (%p1198) target = $region37
    $region36: #{feed_forward.1} parent=1 // pred_region
      %v1201 = vld [vmem:[#allocation2] sm:$0xff]
      %v1202 = vld [vmem:[#allocation2 + $0x8] sm:$0xff]
      %v1203 = vld [vmem:[#allocation2 + $0x10] sm:$0xff]
      %v1204 = vld [vmem:[#allocation2 + $0x18] sm:$0xff]
      %v1205 = vld [vmem:[#allocation2 + $0x20] sm:$0xff]
      %v1206 = vld [vmem:[#allocation2 + $0x28] sm:$0xff]
      %v1207 = vld [vmem:[#allocation2 + $0x30] sm:$0xff]
      %v1208 = vld [vmem:[#allocation2 + $0x38] sm:$0xff]
      %v1209 = vld [vmem:[#allocation2 + $0x40] sm:$0xff]
      %v1210 = vld [vmem:[#allocation2 + $0x48] sm:$0xff]
      %v1211 = vld [vmem:[#allocation2 + $0x50] sm:$0xff]
      %v1212 = vld [vmem:[#allocation2 + $0x58] sm:$0xff]
      %v1213 = vld [vmem:[#allocation2 + $0x60] sm:$0xff]
      %v1214 = vld [vmem:[#allocation2 + $0x68] sm:$0xff]
      %v1215 = vld [vmem:[#allocation2 + $0x70] sm:$0xff]
      %v1216 = vld [vmem:[#allocation2 + $0x78] sm:$0xff]
      %v1217 = vld [vmem:[#allocation2 + $0x80] sm:$0xff]
      %v1218 = vld [vmem:[#allocation2 + $0x88] sm:$0xff]
      %v1219 = vld [vmem:[#allocation2 + $0x90] sm:$0xff]
      %v1220 = vld [vmem:[#allocation2 + $0x98] sm:$0xff]
      %v1221 = vld [vmem:[#allocation2 + $0xa0] sm:$0xff]
      %v1222 = vld [vmem:[#allocation2 + $0xa8] sm:$0xff]
      %v1223 = vld [vmem:[#allocation2 + $0xb0] sm:$0xff]
      %v1224 = vld [vmem:[#allocation2 + $0xb8] sm:$0xff]
      %v1225 = vld [vmem:[#allocation2 + $0xc0] sm:$0xff]
      %v1226 = vld [vmem:[#allocation2 + $0xc8] sm:$0xff]
      %v1227 = vld [vmem:[#allocation2 + $0xd0] sm:$0xff]
      %v1228 = vld [vmem:[#allocation2 + $0xd8] sm:$0xff]
      %v1229 = vld [vmem:[#allocation2 + $0xe0] sm:$0xff]
      %v1230 = vld [vmem:[#allocation2 + $0xe8] sm:$0xff]
      %v1231 = vld [vmem:[#allocation2 + $0xf0] sm:$0xff]
      %v1232 = vld [vmem:[#allocation2 + $0xf8] sm:$0xff]
      %v1233 = vld [vmem:[%s4] sm:$0x3]
      %v1235 = vlaneseq
      %v1236 = vshrl.u32 %v1235, 7
      %v1237 = vsub.s32 0, %v1236
      %v1238 = vrot.slane %v1233, %v1237
      %v1239 = vlaneseq
      %v1240 = vshrl.u32 %v1239, 7
      %v1241 = vsub.s32 1, %v1240
      %v1242 = vrot.slane %v1233, %v1241
      %v1245 = vadd.f32 %v1201, %v1238
      %v1246 = vadd.f32 %v1202, %v1242
      %v1247 = vadd.f32 %v1203, %v1238
      %v1248 = vadd.f32 %v1204, %v1242
      %v1249 = vadd.f32 %v1205, %v1238
      %v1250 = vadd.f32 %v1206, %v1242
      %v1251 = vadd.f32 %v1207, %v1238
      %v1252 = vadd.f32 %v1208, %v1242
      %v1253 = vadd.f32 %v1209, %v1238
      %v1254 = vadd.f32 %v1210, %v1242
      %v1255 = vadd.f32 %v1211, %v1238
      %v1256 = vadd.f32 %v1212, %v1242
      %v1257 = vadd.f32 %v1213, %v1238
      %v1258 = vadd.f32 %v1214, %v1242
      %v1259 = vadd.f32 %v1215, %v1238
      %v1260 = vadd.f32 %v1216, %v1242
      %v1261 = vadd.f32 %v1217, %v1238
      %v1262 = vadd.f32 %v1218, %v1242
      %v1263 = vadd.f32 %v1219, %v1238
      %v1264 = vadd.f32 %v1220, %v1242
      %v1265 = vadd.f32 %v1221, %v1238
      %v1266 = vadd.f32 %v1222, %v1242
      %v1267 = vadd.f32 %v1223, %v1238
      %v1268 = vadd.f32 %v1224, %v1242
      %v1269 = vadd.f32 %v1225, %v1238
      %v1270 = vadd.f32 %v1226, %v1242
      %v1271 = vadd.f32 %v1227, %v1238
      %v1272 = vadd.f32 %v1228, %v1242
      %v1273 = vadd.f32 %v1229, %v1238
      %v1274 = vadd.f32 %v1230, %v1242
      %v1275 = vadd.f32 %v1231, %v1238
      %v1276 = vadd.f32 %v1232, %v1242
      %1277 = vst [vmem:[%s5] sm:$0xff] %v1245
      %1278 = vst [vmem:[%s5 + $0x8] sm:$0xff] %v1246
      %1279 = vst [vmem:[%s5 + $0x10] sm:$0xff] %v1247
      %1280 = vst [vmem:[%s5 + $0x18] sm:$0xff] %v1248
      %1281 = vst [vmem:[%s5 + $0x20] sm:$0xff] %v1249
      %1282 = vst [vmem:[%s5 + $0x28] sm:$0xff] %v1250
      %1283 = vst [vmem:[%s5 + $0x30] sm:$0xff] %v1251
      %1284 = vst [vmem:[%s5 + $0x38] sm:$0xff] %v1252
      %1285 = vst [vmem:[%s5 + $0x40] sm:$0xff] %v1253
      %1286 = vst [vmem:[%s5 + $0x48] sm:$0xff] %v1254
      %1287 = vst [vmem:[%s5 + $0x50] sm:$0xff] %v1255
      %1288 = vst [vmem:[%s5 + $0x58] sm:$0xff] %v1256
      %1289 = vst [vmem:[%s5 + $0x60] sm:$0xff] %v1257
      %1290 = vst [vmem:[%s5 + $0x68] sm:$0xff] %v1258
      %1291 = vst [vmem:[%s5 + $0x70] sm:$0xff] %v1259
      %1292 = vst [vmem:[%s5 + $0x78] sm:$0xff] %v1260
      %1293 = vst [vmem:[%s5 + $0x80] sm:$0xff] %v1261
      %1294 = vst [vmem:[%s5 + $0x88] sm:$0xff] %v1262
      %1295 = vst [vmem:[%s5 + $0x90] sm:$0xff] %v1263
      %1296 = vst [vmem:[%s5 + $0x98] sm:$0xff] %v1264
      %1297 = vst [vmem:[%s5 + $0xa0] sm:$0xff] %v1265
      %1298 = vst [vmem:[%s5 + $0xa8] sm:$0xff] %v1266
      %1299 = vst [vmem:[%s5 + $0xb0] sm:$0xff] %v1267
      %1300 = vst [vmem:[%s5 + $0xb8] sm:$0xff] %v1268
      %1301 = vst [vmem:[%s5 + $0xc0] sm:$0xff] %v1269
      %1302 = vst [vmem:[%s5 + $0xc8] sm:$0xff] %v1270
      %1303 = vst [vmem:[%s5 + $0xd0] sm:$0xff] %v1271
      %1304 = vst [vmem:[%s5 + $0xd8] sm:$0xff] %v1272
      %1305 = vst [vmem:[%s5 + $0xe0] sm:$0xff] %v1273
      %1306 = vst [vmem:[%s5 + $0xe8] sm:$0xff] %v1274
      %1307 = vst [vmem:[%s5 + $0xf0] sm:$0xff] %v1275
      %1308 = vst [vmem:[%s5 + $0xf8] sm:$0xff] %v1276
    $region37: #{feed_forward.1} parent=1 // pred_fallthru
      _
    // Predicated region
    $region38: #{feed_forward.1} parent=1 // pred_check
      _
    $region39: #{feed_forward.1} parent=1 // pred_check_branch
      %1310 = sbr.rel (0) target = $region41
    $region40: #{feed_forward.1} parent=1 // pred_region
      _
    $region41: #{feed_forward.1} parent=1 // pred_fallthru
      _
    // Predicated region
    $region42: #{feed_forward.1} parent=1 // pred_check
      _
    $region43: #{feed_forward.1} parent=1 // pred_check_branch
      %1312 = sbr.rel (0) target = $region45
    $region44: #{feed_forward.1} parent=1 // pred_region
      _
    $region45: #{feed_forward.1} parent=1 // pred_fallthru
      _
    %1313 = vsyncpa [#allocation4], 1
    %1314 = vsyncpa [#allocation6], 1

</llo_original>
